<compile_context>
chip_gen: v5e
topology: v5e:2x2
jax: 0.10.0
libtpu: 0.0.40
codegen_flags: <defaults>
</compile_context>

<pallas_src>
import functools
import math

import jax
import jax.numpy as jnp
from jax.experimental import pallas as pl
from jax.experimental.pallas import tpu as pltpu

F32 = jnp.float32
BF16 = jnp.bfloat16


# ----------------------------- in-kernel helpers -----------------------------
def _layernorm(h, w, b, eps=1e-5):
    mean = jnp.mean(h, axis=-1, keepdims=True)
    var = jnp.mean((h - mean) ** 2, axis=-1, keepdims=True)
    return (h - mean) * jax.lax.rsqrt(var + eps) * w + b


def _gelu_exact(x):
    # nn.GELU default (approximate='none'): 0.5 * x * (1 + erf(x / sqrt(2)))
    return 0.5 * x * (1.0 + jax.lax.erf(x * (1.0 / math.sqrt(2.0))))


def _bf16_dot(a, b):
    # bf16 operands, f32 accumulation on the MXU.
    return jnp.dot(a.astype(BF16), b.astype(BF16), preferred_element_type=F32)


def _mha_one_head(h, x_q, kv_ref, wq_ref, bq_ref, wk_ref, bk_ref, wv_ref, bv_ref,
                  *, s_kv, t_kv, head_dim, scale):
    """Online-softmax (flash) attention for head `h`.

    x_q: (TQ, D) f32 value, kv_ref: (S_kv, D) f32 VMEM ref (KV source rows).
    Returns the per-head context (TQ, head_dim) f32.
    """
    t_q = x_q.shape[0]
    # q projection for this head; fold 1/sqrt(hd) into q (S*hd muls instead of S^2).
    q = (_bf16_dot(x_q, wq_ref[h]) + bq_ref[h]) * scale            # (TQ, hd) f32
    q_b = q.astype(BF16)

    def kv_step(j, carry):
        m, l, acc = carry
        start = pl.multiple_of(j * t_kv, t_kv)
        x_c = kv_ref[pl.ds(start, t_kv), :]                        # (TKV, D) f32
        k_c = _bf16_dot(x_c, wk_ref[h]) + bk_ref[h]                # (TKV, hd) f32
        v_c = _bf16_dot(x_c, wv_ref[h]) + bv_ref[h]                # (TKV, hd) f32
        s = jax.lax.dot_general(q_b, k_c.astype(BF16), (((1,), (1,)), ((), ())),
                                preferred_element_type=F32)        # (TQ, TKV) f32
        m_new = jnp.maximum(m, jnp.max(s, axis=-1, keepdims=True))
        alpha = jnp.exp(m - m_new)
        p = jnp.exp(s - m_new)
        l_new = alpha * l + jnp.sum(p, axis=-1, keepdims=True)
        acc_new = alpha * acc + jnp.dot(p.astype(BF16), v_c.astype(BF16),
                                        preferred_element_type=F32)
        return m_new, l_new, acc_new

    m0 = jnp.full((t_q, 1), -1e30, F32)
    l0 = jnp.zeros((t_q, 1), F32)
    a0 = jnp.zeros((t_q, head_dim), F32)
    _, l, acc = jax.lax.fori_loop(0, s_kv // t_kv, kv_step, (m0, l0, a0))
    return acc * pl.reciprocal(l, approx=True)


def _mha(x_q, kv_ref, wq_ref, bq_ref, wk_ref, bk_ref, wv_ref, bv_ref, wo_ref, bo_ref,
         *, n_head, head_dim, s_kv, t_kv):
    scale = 1.0 / math.sqrt(head_dim)
    t_q, d_model = x_q.shape

    def head_step(h, out_acc):
        ctx = _mha_one_head(h, x_q, kv_ref, wq_ref, bq_ref, wk_ref, bk_ref, wv_ref,
                            bv_ref, s_kv=s_kv, t_kv=t_kv, head_dim=head_dim, scale=scale)
        # concat(heads) @ Wo == sum_h ctx_h @ Wo[h]; accumulate in a single f32 buffer.
        return out_acc + _bf16_dot(ctx, wo_ref[h])

    out = jax.lax.fori_loop(0, n_head, head_step, jnp.zeros((t_q, d_model), F32))
    return out + bo_ref[...]


# --------------------------------- the kernel --------------------------------
def decoder_layer_kernel(
    x_q_ref, x_kv_ref, mem_ref,
    wq_s_ref, bq_s_ref, wk_s_ref, bk_s_ref, wv_s_ref, bv_s_ref, wo_s_ref, bo_s_ref,
    wq_c_ref, bq_c_ref, wk_c_ref, bk_c_ref, wv_c_ref, bv_c_ref, wo_c_ref, bo_c_ref,
    ln1w_ref, ln1b_ref, ln2w_ref, ln2b_ref, ln3w_ref, ln3b_ref,
    w1_ref, b1_ref, w2_ref, b2_ref,
    o_ref,
    *, n_head, head_dim, s_self, s_mem, t_kv_self, t_kv_mem):
    x = x_q_ref[...]                                               # (TQ, D) f32

    # ---- self attention + post-norm residual 1 ----
    sa = _mha(x, x_kv_ref, wq_s_ref, bq_s_ref, wk_s_ref, bk_s_ref, wv_s_ref, bv_s_ref,
              wo_s_ref, bo_s_ref, n_head=n_head, head_dim=head_dim,
              s_kv=s_self, t_kv=t_kv_self)
    h1 = _layernorm(x + sa, ln1w_ref[...], ln1b_ref[...])

    # ---- cross attention (KV = memory) + post-norm residual 2 ----
    ca = _mha(h1, mem_ref, wq_c_ref, bq_c_ref, wk_c_ref, bk_c_ref, wv_c_ref, bv_c_ref,
              wo_c_ref, bo_c_ref, n_head=n_head, head_dim=head_dim,
              s_kv=s_mem, t_kv=t_kv_mem)
    h2 = _layernorm(h1 + ca, ln2w_ref[...], ln2b_ref[...])

    # ---- MLP (fc1 -> exact-erf GELU -> fc2) + post-norm residual 3 ----
    hmid = _gelu_exact(_bf16_dot(h2, w1_ref[...]) + b1_ref[...])
    mlp = _bf16_dot(hmid, w2_ref[...]) + b2_ref[...]
    o_ref[...] = _layernorm(h2 + mlp, ln3w_ref[...], ln3b_ref[...])


# --------------------------------- wrapper ------------------------------------
def _split_heads_in_out(w, n_head):
    # (D_in, n_head*hd) -> (n_head, D_in, hd)   (columns ordered head-major, then hd)
    d_in, d_out = w.shape
    hd = d_out // n_head
    return jnp.transpose(w.reshape(d_in, n_head, hd), (1, 0, 2))


def _split_heads_bias(b, n_head):
    # (n_head*hd,) -> (n_head, 1, hd)
    return b.reshape(n_head, 1, -1)


def flash_tx_decoder_layer(x, memory, params, *, n_head, q_tile=128, kv_tile=512):
    B, S, D = x.shape
    Bm, SM, Dm = memory.shape
    assert Bm == B and Dm == D and D % n_head == 0
    head_dim = D // n_head

    t_q = S if S <= q_tile else q_tile
    assert S % t_q == 0, "S must be a multiple of the query tile"
    t_kv_self = S if S <= kv_tile else kv_tile
    assert S % t_kv_self == 0
    t_kv_mem = SM if SM <= kv_tile else kv_tile
    assert SM % t_kv_mem == 0

    mlp_width = params["w1"].shape[1]

    # --- host-side weight preprocessing: per-head layouts; matmul weights in bf16 ---
    wqkv = params["wqkv"]                                   # (D, 3D), columns (q|k|v)
    wq_s = _split_heads_in_out(wqkv[:, 0 * D:1 * D], n_head).astype(BF16)
    wk_s = _split_heads_in_out(wqkv[:, 1 * D:2 * D], n_head).astype(BF16)
    wv_s = _split_heads_in_out(wqkv[:, 2 * D:3 * D], n_head).astype(BF16)
    bqkv = params["bqkv"].reshape(-1)
    bq_s = _split_heads_bias(bqkv[0 * D:1 * D], n_head).astype(F32)
    bk_s = _split_heads_bias(bqkv[1 * D:2 * D], n_head).astype(F32)
    bv_s = _split_heads_bias(bqkv[2 * D:3 * D], n_head).astype(F32)
    wo_s = params["wo_self"].reshape(n_head, head_dim, D).astype(BF16)
    bo_s = params["bo_self"].reshape(1, D).astype(F32)

    wq_c = _split_heads_in_out(params["wq_cross"], n_head).astype(BF16)
    bq_c = _split_heads_bias(params["bq_cross"].reshape(-1), n_head).astype(F32)
    wkv = params["wkv_cross"]                               # (D, 2D), columns (k|v)
    wk_c = _split_heads_in_out(wkv[:, 0 * D:1 * D], n_head).astype(BF16)
    wv_c = _split_heads_in_out(wkv[:, 1 * D:2 * D], n_head).astype(BF16)
    bkv = params["bkv_cross"].reshape(-1)
    bk_c = _split_heads_bias(bkv[0 * D:1 * D], n_head).astype(F32)
    bv_c = _split_heads_bias(bkv[1 * D:2 * D], n_head).astype(F32)
    wo_c = params["wo_cross"].reshape(n_head, head_dim, D).astype(BF16)
    bo_c = params["bo_cross"].reshape(1, D).astype(F32)

    w1 = params["w1"].astype(BF16)
    b1 = params["b1"].reshape(1, mlp_width).astype(F32)
    w2 = params["w2"].astype(BF16)
    b2 = params["b2"].reshape(1, D).astype(F32)

    ln1w = params["ln1_w"].reshape(1, D).astype(F32)
    ln1b = params["ln1_b"].reshape(1, D).astype(F32)
    ln2w = params["ln2_w"].reshape(1, D).astype(F32)
    ln2b = params["ln2_b"].reshape(1, D).astype(F32)
    ln3w = params["ln3_w"].reshape(1, D).astype(F32)
    ln3b = params["ln3_b"].reshape(1, D).astype(F32)

    kernel = functools.partial(
        decoder_layer_kernel, n_head=n_head, head_dim=head_dim,
        s_self=S, s_mem=SM, t_kv_self=t_kv_self, t_kv_mem=t_kv_mem)

    def fullspec(shape):
        return pl.BlockSpec(shape, lambda b, q: (0,) * len(shape))

    in_specs = [
        pl.BlockSpec((None, t_q, D), lambda b, q: (b, q, 0)),   # x query tile
        pl.BlockSpec((None, S, D), lambda b, q: (b, 0, 0)),     # x full (self-attn KV source)
        pl.BlockSpec((None, SM, D), lambda b, q: (b, 0, 0)),    # memory (cross-attn KV source)
        fullspec((n_head, D, head_dim)),   # wq_s
        fullspec((n_head, 1, head_dim)),   # bq_s
        fullspec((n_head, D, head_dim)),   # wk_s
        fullspec((n_head, 1, head_dim)),   # bk_s
        fullspec((n_head, D, head_dim)),   # wv_s
        fullspec((n_head, 1, head_dim)),   # bv_s
        fullspec((n_head, head_dim, D)),   # wo_s
        fullspec((1, D)),                  # bo_s
        fullspec((n_head, D, head_dim)),   # wq_c
        fullspec((n_head, 1, head_dim)),   # bq_c
        fullspec((n_head, D, head_dim)),   # wk_c
        fullspec((n_head, 1, head_dim)),   # bk_c
        fullspec((n_head, D, head_dim)),   # wv_c
        fullspec((n_head, 1, head_dim)),   # bv_c
        fullspec((n_head, head_dim, D)),   # wo_c
        fullspec((1, D)),                  # bo_c
        fullspec((1, D)), fullspec((1, D)),   # ln1 w, b
        fullspec((1, D)), fullspec((1, D)),   # ln2 w, b
        fullspec((1, D)), fullspec((1, D)),   # ln3 w, b
        fullspec((D, mlp_width)),          # w1
        fullspec((1, mlp_width)),          # b1
        fullspec((mlp_width, D)),          # w2
        fullspec((1, D)),                  # b2
    ]
    out_spec = pl.BlockSpec((None, t_q, D), lambda b, q: (b, q, 0))

    # Explicit VMEM budget: bf16 weights + f32 activation blocks (x2 double buffering)
    # + in-kernel intermediates; clamped to [32 MiB, 64 MiB] so it is legal on v5e/v6e/v7x.
    weight_bytes = 2 * (8 * D * D + 2 * D * mlp_width)
    act_bytes = 4 * D * (2 * t_q + S + SM)
    interm_bytes = 4 * (t_q * mlp_width + 4 * t_q * D + 2 * t_q * max(t_kv_self, t_kv_mem))
    est = 2 * (weight_bytes + act_bytes) + interm_bytes
    vmem_limit = int(min(64 * 1024 * 1024, max(32 * 1024 * 1024, 2 * est)))

    return pl.pallas_call(
        kernel,
        out_shape=jax.ShapeDtypeStruct((B, S, D), F32),
        grid=(B, S // t_q),
        in_specs=in_specs,
        out_specs=out_spec,
        compiler_params=pltpu.CompilerParams(
            dimension_semantics=("parallel", "parallel"),
            vmem_limit_bytes=vmem_limit),
    )(
        x.astype(F32), x.astype(F32), memory.astype(F32),
        wq_s, bq_s, wk_s, bk_s, wv_s, bv_s, wo_s, bo_s,
        wq_c, bq_c, wk_c, bk_c, wv_c, bv_c, wo_c, bo_c,
        ln1w, ln1b, ln2w, ln2b, ln3w, ln3b,
        w1, b1, w2, b2,
    )


# ---------------- pure-JAX reference (mirrors the kernel's bf16 rounding) ----------------
def _ref_bf16_mm(a, b):
    return jnp.dot(a.astype(BF16), b.astype(BF16), preferred_element_type=F32).astype(F32)


def _ref_mha(xq, xkv, wq, bq, wk, bk, wv, bv, wo, bo, n_head):
    B, Sq, D = xq.shape
    hd = D // n_head
    scale = 1.0 / math.sqrt(hd)
    q = (_ref_bf16_mm(xq, wq) + bq) * scale
    k = _ref_bf16_mm(xkv, wk) + bk
    v = _ref_bf16_mm(xkv, wv) + bv
    q = q.reshape(B, Sq, n_head, hd).transpose(0, 2, 1, 3)
    k = k.reshape(B, -1, n_head, hd).transpose(0, 2, 1, 3)
    v = v.reshape(B, -1, n_head, hd).transpose(0, 2, 1, 3)
    s = jnp.einsum("bhqd,bhkd->bhqk", q.astype(BF16), k.astype(BF16),
                   preferred_element_type=F32).astype(F32)
    m = jnp.max(s, axis=-1, keepdims=True)
    e = jnp.exp(s - m)
    denom = jnp.sum(e, axis=-1, keepdims=True)
    ctx = jnp.einsum("bhqk,bhkd->bhqd", e.astype(BF16), v.astype(BF16),
                     preferred_element_type=F32).astype(F32) / denom
    ctx = ctx.transpose(0, 2, 1, 3).reshape(B, Sq, D)
    return _ref_bf16_mm(ctx, wo) + bo


def reference(x, memory, params, *, n_head):
    D = x.shape[-1]

    def ln(h, w, b, eps=1e-5):
        mu = jnp.mean(h, -1, keepdims=True)
        var = jnp.mean((h - mu) ** 2, -1, keepdims=True)
        return (h - mu) / jnp.sqrt(var + eps) * w + b

    wqkv = params["wqkv"]; bqkv = params["bqkv"].reshape(-1)
    sa = _ref_mha(x, x, wqkv[:, :D], bqkv[:D], wqkv[:, D:2 * D], bqkv[D:2 * D],
                  wqkv[:, 2 * D:], bqkv[2 * D:], params["wo_self"],
                  params["bo_self"].reshape(-1), n_head)
    h1 = ln(x + sa, params["ln1_w"], params["ln1_b"])

    wkv = params["wkv_cross"]; bkv = params["bkv_cross"].reshape(-1)
    ca = _ref_mha(h1, memory, params["wq_cross"], params["bq_cross"].reshape(-1),
                  wkv[:, :D], bkv[:D], wkv[:, D:], bkv[D:],
                  params["wo_cross"], params["bo_cross"].reshape(-1), n_head)
    h2 = ln(h1 + ca, params["ln2_w"], params["ln2_b"])

    hmid = jax.nn.gelu(_ref_bf16_mm(h2, params["w1"]) + params["b1"], approximate=False)
    mlp = _ref_bf16_mm(hmid, params["w2"]) + params["b2"]
    return ln(h2 + mlp, params["ln3_w"], params["ln3_b"])


if __name__ == "__main__":
    B, S, SM = 2, 8, 16          # batch, decoder seq, memory seq
    D, n_head = 32, 4            # d_model, heads
    mlp_width = int(D * 4.0)

    key = jax.random.PRNGKey(0)
    ks = jax.random.split(key, 20)

    def nrm(k, shape, scale=0.05):
        return scale * jax.random.normal(k, shape, F32)

    params = {
        "wqkv": nrm(ks[0], (D, 3 * D)),
        "bqkv": nrm(ks[1], (3 * D,)),
        "wo_self": nrm(ks[2], (D, D)),
        "bo_self": nrm(ks[3], (D,)),
        "wq_cross": nrm(ks[4], (D, D)),
        "bq_cross": nrm(ks[5], (D,)),
        "wkv_cross": nrm(ks[6], (D, 2 * D)),
        "bkv_cross": nrm(ks[7], (2 * D,)),
        "wo_cross": nrm(ks[8], (D, D)),
        "bo_cross": nrm(ks[9], (D,)),
        "ln1_w": 1.0 + nrm(ks[10], (D,)),
        "ln1_b": nrm(ks[11], (D,)),
        "ln2_w": 1.0 + nrm(ks[12], (D,)),
        "ln2_b": nrm(ks[13], (D,)),
        "ln3_w": 1.0 + nrm(ks[14], (D,)),
        "ln3_b": nrm(ks[15], (D,)),
        "w1": nrm(ks[16], (D, mlp_width)),
        "b1": nrm(ks[17], (mlp_width,)),
        "w2": nrm(ks[18], (mlp_width, D)),
        "b2": nrm(ks[19], (D,)),
    }

    x = jax.random.normal(jax.random.PRNGKey(1), (B, S, D), F32)
    memory = jax.random.normal(jax.random.PRNGKey(2), (B, SM, D), F32)

    out = flash_tx_decoder_layer(x, memory, params, n_head=n_head)
    out = jax.block_until_ready(out)

    ref = reference(x, memory, params, n_head=n_head)
    assert out.shape == (B, S, D)
    err = float(jnp.max(jnp.abs(out - ref)))
    assert err < 5e-2, err
    print("KERNEL_OK")
</pallas_src>

<mosaic_0001>
module attributes {stable_mosaic.version = 11 : i64} {
  func.func @decoder_layer_kernel(%arg0: i32, %arg1: i32, %arg2: memref<1x8x32xf32, #tpu.memory_space<vmem>>, %arg3: memref<1x8x32xf32, #tpu.memory_space<vmem>>, %arg4: memref<1x16x32xf32, #tpu.memory_space<vmem>>, %arg5: memref<4x32x8xbf16, #tpu.memory_space<vmem>>, %arg6: memref<4x1x8xf32, #tpu.memory_space<vmem>>, %arg7: memref<4x32x8xbf16, #tpu.memory_space<vmem>>, %arg8: memref<4x1x8xf32, #tpu.memory_space<vmem>>, %arg9: memref<4x32x8xbf16, #tpu.memory_space<vmem>>, %arg10: memref<4x1x8xf32, #tpu.memory_space<vmem>>, %arg11: memref<4x8x32xbf16, #tpu.memory_space<vmem>>, %arg12: memref<1x32xf32, #tpu.memory_space<vmem>>, %arg13: memref<4x32x8xbf16, #tpu.memory_space<vmem>>, %arg14: memref<4x1x8xf32, #tpu.memory_space<vmem>>, %arg15: memref<4x32x8xbf16, #tpu.memory_space<vmem>>, %arg16: memref<4x1x8xf32, #tpu.memory_space<vmem>>, %arg17: memref<4x32x8xbf16, #tpu.memory_space<vmem>>, %arg18: memref<4x1x8xf32, #tpu.memory_space<vmem>>, %arg19: memref<4x8x32xbf16, #tpu.memory_space<vmem>>, %arg20: memref<1x32xf32, #tpu.memory_space<vmem>>, %arg21: memref<1x32xf32, #tpu.memory_space<vmem>>, %arg22: memref<1x32xf32, #tpu.memory_space<vmem>>, %arg23: memref<1x32xf32, #tpu.memory_space<vmem>>, %arg24: memref<1x32xf32, #tpu.memory_space<vmem>>, %arg25: memref<1x32xf32, #tpu.memory_space<vmem>>, %arg26: memref<1x32xf32, #tpu.memory_space<vmem>>, %arg27: memref<32x128xbf16, #tpu.memory_space<vmem>>, %arg28: memref<1x128xf32, #tpu.memory_space<vmem>>, %arg29: memref<128x32xbf16, #tpu.memory_space<vmem>>, %arg30: memref<1x32xf32, #tpu.memory_space<vmem>>, %arg31: memref<1x8x32xf32, #tpu.memory_space<vmem>>) attributes {dimension_semantics = [#tpu.dimension_semantics<parallel>, #tpu.dimension_semantics<parallel>], iteration_bounds = array<i64: 2, 1>, scalar_prefetch = 0 : i64, scratch_operands = 0 : i64, tpu.core_type = #tpu.core_type<tc>, window_params = [{transform_indices = @transform_0, window_bounds = array<i64: 1, 8, 32>}, {transform_indices = @transform_1, window_bounds = array<i64: 1, 8, 32>}, {transform_indices = @transform_2, window_bounds = array<i64: 1, 16, 32>}, {pipeline_mode = #tpu.pipeline_mode<synchronous>, transform_indices = @transform_3, window_bounds = array<i64: 4, 32, 8>}, {pipeline_mode = #tpu.pipeline_mode<synchronous>, transform_indices = @transform_4, window_bounds = array<i64: 4, 1, 8>}, {pipeline_mode = #tpu.pipeline_mode<synchronous>, transform_indices = @transform_5, window_bounds = array<i64: 4, 32, 8>}, {pipeline_mode = #tpu.pipeline_mode<synchronous>, transform_indices = @transform_6, window_bounds = array<i64: 4, 1, 8>}, {pipeline_mode = #tpu.pipeline_mode<synchronous>, transform_indices = @transform_7, window_bounds = array<i64: 4, 32, 8>}, {pipeline_mode = #tpu.pipeline_mode<synchronous>, transform_indices = @transform_8, window_bounds = array<i64: 4, 1, 8>}, {pipeline_mode = #tpu.pipeline_mode<synchronous>, transform_indices = @transform_9, window_bounds = array<i64: 4, 8, 32>}, {pipeline_mode = #tpu.pipeline_mode<synchronous>, transform_indices = @transform_10, window_bounds = array<i64: 1, 32>}, {pipeline_mode = #tpu.pipeline_mode<synchronous>, transform_indices = @transform_11, window_bounds = array<i64: 4, 32, 8>}, {pipeline_mode = #tpu.pipeline_mode<synchronous>, transform_indices = @transform_12, window_bounds = array<i64: 4, 1, 8>}, {pipeline_mode = #tpu.pipeline_mode<synchronous>, transform_indices = @transform_13, window_bounds = array<i64: 4, 32, 8>}, {pipeline_mode = #tpu.pipeline_mode<synchronous>, transform_indices = @transform_14, window_bounds = array<i64: 4, 1, 8>}, {pipeline_mode = #tpu.pipeline_mode<synchronous>, transform_indices = @transform_15, window_bounds = array<i64: 4, 32, 8>}, {pipeline_mode = #tpu.pipeline_mode<synchronous>, transform_indices = @transform_16, window_bounds = array<i64: 4, 1, 8>}, {pipeline_mode = #tpu.pipeline_mode<synchronous>, transform_indices = @transform_17, window_bounds = array<i64: 4, 8, 32>}, {pipeline_mode = #tpu.pipeline_mode<synchronous>, transform_indices = @transform_18, window_bounds = array<i64: 1, 32>}, {pipeline_mode = #tpu.pipeline_mode<synchronous>, transform_indices = @transform_19, window_bounds = array<i64: 1, 32>}, {pipeline_mode = #tpu.pipeline_mode<synchronous>, transform_indices = @transform_20, window_bounds = array<i64: 1, 32>}, {pipeline_mode = #tpu.pipeline_mode<synchronous>, transform_indices = @transform_21, window_bounds = array<i64: 1, 32>}, {pipeline_mode = #tpu.pipeline_mode<synchronous>, transform_indices = @transform_22, window_bounds = array<i64: 1, 32>}, {pipeline_mode = #tpu.pipeline_mode<synchronous>, transform_indices = @transform_23, window_bounds = array<i64: 1, 32>}, {pipeline_mode = #tpu.pipeline_mode<synchronous>, transform_indices = @transform_24, window_bounds = array<i64: 1, 32>}, {pipeline_mode = #tpu.pipeline_mode<synchronous>, transform_indices = @transform_25, window_bounds = array<i64: 32, 128>}, {pipeline_mode = #tpu.pipeline_mode<synchronous>, transform_indices = @transform_26, window_bounds = array<i64: 1, 128>}, {pipeline_mode = #tpu.pipeline_mode<synchronous>, transform_indices = @transform_27, window_bounds = array<i64: 128, 32>}, {pipeline_mode = #tpu.pipeline_mode<synchronous>, transform_indices = @transform_28, window_bounds = array<i64: 1, 32>}, {transform_indices = @transform_29, window_bounds = array<i64: 1, 8, 32>}]} {
    %c0 = arith.constant 0 : index
    %c0_0 = arith.constant 0 : index
    %c0_1 = arith.constant 0 : index
    %0 = vector.load %arg2[%c0, %c0_0, %c0_1] : memref<1x8x32xf32, #tpu.memory_space<vmem>>, vector<1x8x32xf32>
    %1 = vector.shape_cast %0 : vector<1x8x32xf32> to vector<8x32xf32>
    %cst = arith.constant 0.000000e+00 : f32
    %2 = vector.broadcast %cst : f32 to vector<8x32xf32>
    %c0_i32 = arith.constant 0 : i32
    %c4_i32 = arith.constant 4 : i32
    %3 = arith.addi %c0_i32, %c4_i32 : i32
    %c1_i32 = arith.constant 1 : i32
    %4 = scf.for %arg32 = %c0_i32 to %3 step %c1_i32 iter_args(%arg33 = %2) -> (vector<8x32xf32>)  : i32 {
      %112 = arith.index_cast %arg32 : i32 to index
      %c0_55 = arith.constant 0 : index
      %c0_56 = arith.constant 0 : index
      %113 = vector.load %arg5[%112, %c0_55, %c0_56] : memref<4x32x8xbf16, #tpu.memory_space<vmem>>, vector<1x32x8xbf16>
      %114 = vector.shape_cast %113 : vector<1x32x8xbf16> to vector<32x8xbf16>
      %115 = arith.truncf %1 : vector<8x32xf32> to vector<8x32xbf16>
      %cst_57 = arith.constant dense<0.000000e+00> : vector<8x8xf32>
      %116 = tpu.matmul %115, %114, %cst_57 {dimension_numbers = #tpu.dot_dimension_numbers<[1], [0], [0], [1], [0, 0, 1, 1], [], []>} : vector<8x32xbf16>, vector<32x8xbf16>, vector<8x8xf32> -> vector<8x8xf32>
      %117 = arith.index_cast %arg32 : i32 to index
      %c0_58 = arith.constant 0 : index
      %c0_59 = arith.constant 0 : index
      %118 = vector.load %arg6[%117, %c0_58, %c0_59] : memref<4x1x8xf32, #tpu.memory_space<vmem>>, vector<1x1x8xf32>
      %119 = vector.shape_cast %118 : vector<1x1x8xf32> to vector<1x8xf32>
      %120 = vector.broadcast %119 : vector<1x8xf32> to vector<8x8xf32>
      %121 = arith.addf %116, %120 : vector<8x8xf32>
      %cst_60 = arith.constant 0.353553385 : f32
      %122 = vector.broadcast %cst_60 : f32 to vector<8x8xf32>
      %123 = arith.mulf %121, %122 : vector<8x8xf32>
      %124 = arith.truncf %123 : vector<8x8xf32> to vector<8x8xbf16>
      %cst_61 = arith.constant -1.000000e+30 : f32
      %125 = vector.broadcast %cst_61 : f32 to vector<8x1xf32>
      %cst_62 = arith.constant 0.000000e+00 : f32
      %126 = vector.broadcast %cst_62 : f32 to vector<8x1xf32>
      %cst_63 = arith.constant 0.000000e+00 : f32
      %127 = vector.broadcast %cst_63 : f32 to vector<8x8xf32>
      %c0_i32_64 = arith.constant 0 : i32
      %c8_i32 = arith.constant 8 : i32
      %128 = arith.muli %c0_i32_64, %c8_i32 : i32
      %129 = tpu.assume_multiple %128, 8 : i32
      %c0_65 = arith.constant 0 : index
      %130 = arith.index_cast %129 : i32 to index
      %c0_66 = arith.constant 0 : index
      %131 = vector.load %arg3[%c0_65, %130, %c0_66] : memref<1x8x32xf32, #tpu.memory_space<vmem>>, vector<1x8x32xf32>
      %132 = vector.shape_cast %131 : vector<1x8x32xf32> to vector<8x32xf32>
      %133 = arith.index_cast %arg32 : i32 to index
      %c0_67 = arith.constant 0 : index
      %c0_68 = arith.constant 0 : index
      %134 = vector.load %arg7[%133, %c0_67, %c0_68] : memref<4x32x8xbf16, #tpu.memory_space<vmem>>, vector<1x32x8xbf16>
      %135 = vector.shape_cast %134 : vector<1x32x8xbf16> to vector<32x8xbf16>
      %136 = arith.truncf %132 : vector<8x32xf32> to vector<8x32xbf16>
      %cst_69 = arith.constant dense<0.000000e+00> : vector<8x8xf32>
      %137 = tpu.matmul %136, %135, %cst_69 {dimension_numbers = #tpu.dot_dimension_numbers<[1], [0], [0], [1], [0, 0, 1, 1], [], []>} : vector<8x32xbf16>, vector<32x8xbf16>, vector<8x8xf32> -> vector<8x8xf32>
      %138 = arith.index_cast %arg32 : i32 to index
      %c0_70 = arith.constant 0 : index
      %c0_71 = arith.constant 0 : index
      %139 = vector.load %arg8[%138, %c0_70, %c0_71] : memref<4x1x8xf32, #tpu.memory_space<vmem>>, vector<1x1x8xf32>
      %140 = vector.shape_cast %139 : vector<1x1x8xf32> to vector<1x8xf32>
      %141 = vector.broadcast %140 : vector<1x8xf32> to vector<8x8xf32>
      %142 = arith.addf %137, %141 : vector<8x8xf32>
      %143 = arith.index_cast %arg32 : i32 to index
      %c0_72 = arith.constant 0 : index
      %c0_73 = arith.constant 0 : index
      %144 = vector.load %arg9[%143, %c0_72, %c0_73] : memref<4x32x8xbf16, #tpu.memory_space<vmem>>, vector<1x32x8xbf16>
      %145 = vector.shape_cast %144 : vector<1x32x8xbf16> to vector<32x8xbf16>
      %146 = arith.truncf %132 : vector<8x32xf32> to vector<8x32xbf16>
      %cst_74 = arith.constant dense<0.000000e+00> : vector<8x8xf32>
      %147 = tpu.matmul %146, %145, %cst_74 {dimension_numbers = #tpu.dot_dimension_numbers<[1], [0], [0], [1], [0, 0, 1, 1], [], []>} : vector<8x32xbf16>, vector<32x8xbf16>, vector<8x8xf32> -> vector<8x8xf32>
      %148 = arith.index_cast %arg32 : i32 to index
      %c0_75 = arith.constant 0 : index
      %c0_76 = arith.constant 0 : index
      %149 = vector.load %arg10[%148, %c0_75, %c0_76] : memref<4x1x8xf32, #tpu.memory_space<vmem>>, vector<1x1x8xf32>
      %150 = vector.shape_cast %149 : vector<1x1x8xf32> to vector<1x8xf32>
      %151 = vector.broadcast %150 : vector<1x8xf32> to vector<8x8xf32>
      %152 = arith.addf %147, %151 : vector<8x8xf32>
      %153 = arith.truncf %142 : vector<8x8xf32> to vector<8x8xbf16>
      %cst_77 = arith.constant dense<0.000000e+00> : vector<8x8xf32>
      %154 = tpu.matmul %124, %153, %cst_77 {dimension_numbers = #tpu.dot_dimension_numbers<[1], [1], [0], [0], [0, 0, 1, 0], [], []>} : vector<8x8xbf16>, vector<8x8xbf16>, vector<8x8xf32> -> vector<8x8xf32>
      %cst_78 = arith.constant dense<0xFF800000> : vector<8xf32>
      %155 = vector.multi_reduction <maximumf>, %154, %cst_78 [1] : vector<8x8xf32> to vector<8xf32>
      %156 = vector.shape_cast %155 : vector<8xf32> to vector<8x1xf32>
      %157 = arith.maximumf %125, %156 : vector<8x1xf32>
      %158 = arith.subf %125, %157 : vector<8x1xf32>
      %159 = math.exp %158 : vector<8x1xf32>
      %160 = vector.broadcast %157 : vector<8x1xf32> to vector<8x8xf32>
      %161 = arith.subf %154, %160 : vector<8x8xf32>
      %162 = math.exp %161 : vector<8x8xf32>
      %163 = arith.mulf %159, %126 : vector<8x1xf32>
      %cst_79 = arith.constant dense<0.000000e+00> : vector<8xf32>
      %164 = vector.multi_reduction <add>, %162, %cst_79 [1] : vector<8x8xf32> to vector<8xf32>
      %165 = vector.shape_cast %164 : vector<8xf32> to vector<8x1xf32>
      %166 = arith.addf %163, %165 : vector<8x1xf32>
      %167 = vector.broadcast %159 : vector<8x1xf32> to vector<8x8xf32>
      %168 = arith.mulf %167, %127 : vector<8x8xf32>
      %169 = arith.truncf %162 : vector<8x8xf32> to vector<8x8xbf16>
      %170 = arith.truncf %152 : vector<8x8xf32> to vector<8x8xbf16>
      %cst_80 = arith.constant dense<0.000000e+00> : vector<8x8xf32>
      %171 = tpu.matmul %169, %170, %cst_80 {dimension_numbers = #tpu.dot_dimension_numbers<[1], [0], [0], [1], [0, 0, 1, 1], [], []>} : vector<8x8xbf16>, vector<8x8xbf16>, vector<8x8xf32> -> vector<8x8xf32>
      %172 = arith.addf %168, %171 : vector<8x8xf32>
      %c1_i32_81 = arith.constant 1 : i32
      %173 = tpu.reciprocal %166 {approx = true} : vector<8x1xf32> -> vector<8x1xf32>
      %174 = vector.broadcast %173 : vector<8x1xf32> to vector<8x8xf32>
      %175 = arith.mulf %172, %174 : vector<8x8xf32>
      %176 = arith.index_cast %arg32 : i32 to index
      %c0_82 = arith.constant 0 : index
      %c0_83 = arith.constant 0 : index
      %177 = vector.load %arg11[%176, %c0_82, %c0_83] : memref<4x8x32xbf16, #tpu.memory_space<vmem>>, vector<1x8x32xbf16>
      %178 = vector.shape_cast %177 : vector<1x8x32xbf16> to vector<8x32xbf16>
      %179 = arith.truncf %175 : vector<8x8xf32> to vector<8x8xbf16>
      %cst_84 = arith.constant dense<0.000000e+00> : vector<8x32xf32>
      %180 = tpu.matmul %179, %178, %cst_84 {dimension_numbers = #tpu.dot_dimension_numbers<[1], [0], [0], [1], [0, 0, 1, 1], [], []>} : vector<8x8xbf16>, vector<8x32xbf16>, vector<8x32xf32> -> vector<8x32xf32>
      %181 = arith.addf %arg33, %180 : vector<8x32xf32>
      scf.yield %181 : vector<8x32xf32>
    }
    %c4_i32_2 = arith.constant 4 : i32
    %c0_3 = arith.constant 0 : index
    %c0_4 = arith.constant 0 : index
    %5 = vector.load %arg12[%c0_3, %c0_4] : memref<1x32xf32, #tpu.memory_space<vmem>>, vector<1x32xf32>
    %6 = vector.broadcast %5 : vector<1x32xf32> to vector<8x32xf32>
    %7 = arith.addf %4, %6 : vector<8x32xf32>
    %8 = arith.addf %1, %7 : vector<8x32xf32>
    %c0_5 = arith.constant 0 : index
    %c0_6 = arith.constant 0 : index
    %9 = vector.load %arg21[%c0_5, %c0_6] : memref<1x32xf32, #tpu.memory_space<vmem>>, vector<1x32xf32>
    %c0_7 = arith.constant 0 : index
    %c0_8 = arith.constant 0 : index
    %10 = vector.load %arg22[%c0_7, %c0_8] : memref<1x32xf32, #tpu.memory_space<vmem>>, vector<1x32xf32>
    %cst_9 = arith.constant dense<0.000000e+00> : vector<8xf32>
    %11 = vector.multi_reduction <add>, %8, %cst_9 [1] : vector<8x32xf32> to vector<8xf32>
    %12 = vector.shape_cast %11 : vector<8xf32> to vector<8x1xf32>
    %cst_10 = arith.constant 3.200000e+01 : f32
    %13 = vector.broadcast %cst_10 : f32 to vector<8x1xf32>
    %14 = arith.divf %12, %13 : vector<8x1xf32>
    %15 = vector.broadcast %14 : vector<8x1xf32> to vector<8x32xf32>
    %16 = arith.subf %8, %15 : vector<8x32xf32>
    %17 = arith.mulf %16, %16 : vector<8x32xf32>
    %cst_11 = arith.constant dense<0.000000e+00> : vector<8xf32>
    %18 = vector.multi_reduction <add>, %17, %cst_11 [1] : vector<8x32xf32> to vector<8xf32>
    %19 = vector.shape_cast %18 : vector<8xf32> to vector<8x1xf32>
    %cst_12 = arith.constant 3.200000e+01 : f32
    %20 = vector.broadcast %cst_12 : f32 to vector<8x1xf32>
    %21 = arith.divf %19, %20 : vector<8x1xf32>
    %22 = vector.broadcast %14 : vector<8x1xf32> to vector<8x32xf32>
    %23 = arith.subf %8, %22 : vector<8x32xf32>
    %cst_13 = arith.constant 9.99999974E-6 : f32
    %24 = vector.broadcast %cst_13 : f32 to vector<8x1xf32>
    %25 = arith.addf %21, %24 : vector<8x1xf32>
    %26 = math.rsqrt %25 : vector<8x1xf32>
    %27 = vector.broadcast %26 : vector<8x1xf32> to vector<8x32xf32>
    %28 = arith.mulf %23, %27 : vector<8x32xf32>
    %29 = vector.broadcast %9 : vector<1x32xf32> to vector<8x32xf32>
    %30 = arith.mulf %28, %29 : vector<8x32xf32>
    %31 = vector.broadcast %10 : vector<1x32xf32> to vector<8x32xf32>
    %32 = arith.addf %30, %31 : vector<8x32xf32>
    %cst_14 = arith.constant 0.000000e+00 : f32
    %33 = vector.broadcast %cst_14 : f32 to vector<8x32xf32>
    %c0_i32_15 = arith.constant 0 : i32
    %c4_i32_16 = arith.constant 4 : i32
    %34 = arith.addi %c0_i32_15, %c4_i32_16 : i32
    %c1_i32_17 = arith.constant 1 : i32
    %35 = scf.for %arg32 = %c0_i32_15 to %34 step %c1_i32_17 iter_args(%arg33 = %33) -> (vector<8x32xf32>)  : i32 {
      %112 = arith.index_cast %arg32 : i32 to index
      %c0_55 = arith.constant 0 : index
      %c0_56 = arith.constant 0 : index
      %113 = vector.load %arg13[%112, %c0_55, %c0_56] : memref<4x32x8xbf16, #tpu.memory_space<vmem>>, vector<1x32x8xbf16>
      %114 = vector.shape_cast %113 : vector<1x32x8xbf16> to vector<32x8xbf16>
      %115 = arith.truncf %32 : vector<8x32xf32> to vector<8x32xbf16>
      %cst_57 = arith.constant dense<0.000000e+00> : vector<8x8xf32>
      %116 = tpu.matmul %115, %114, %cst_57 {dimension_numbers = #tpu.dot_dimension_numbers<[1], [0], [0], [1], [0, 0, 1, 1], [], []>} : vector<8x32xbf16>, vector<32x8xbf16>, vector<8x8xf32> -> vector<8x8xf32>
      %117 = arith.index_cast %arg32 : i32 to index
      %c0_58 = arith.constant 0 : index
      %c0_59 = arith.constant 0 : index
      %118 = vector.load %arg14[%117, %c0_58, %c0_59] : memref<4x1x8xf32, #tpu.memory_space<vmem>>, vector<1x1x8xf32>
      %119 = vector.shape_cast %118 : vector<1x1x8xf32> to vector<1x8xf32>
      %120 = vector.broadcast %119 : vector<1x8xf32> to vector<8x8xf32>
      %121 = arith.addf %116, %120 : vector<8x8xf32>
      %cst_60 = arith.constant 0.353553385 : f32
      %122 = vector.broadcast %cst_60 : f32 to vector<8x8xf32>
      %123 = arith.mulf %121, %122 : vector<8x8xf32>
      %124 = arith.truncf %123 : vector<8x8xf32> to vector<8x8xbf16>
      %cst_61 = arith.constant -1.000000e+30 : f32
      %125 = vector.broadcast %cst_61 : f32 to vector<8x1xf32>
      %cst_62 = arith.constant 0.000000e+00 : f32
      %126 = vector.broadcast %cst_62 : f32 to vector<8x1xf32>
      %cst_63 = arith.constant 0.000000e+00 : f32
      %127 = vector.broadcast %cst_63 : f32 to vector<8x8xf32>
      %c0_i32_64 = arith.constant 0 : i32
      %c16_i32 = arith.constant 16 : i32
      %128 = arith.muli %c0_i32_64, %c16_i32 : i32
      %129 = tpu.assume_multiple %128, 16 : i32
      %c0_65 = arith.constant 0 : index
      %130 = arith.index_cast %129 : i32 to index
      %c0_66 = arith.constant 0 : index
      %131 = vector.load %arg4[%c0_65, %130, %c0_66] : memref<1x16x32xf32, #tpu.memory_space<vmem>>, vector<1x16x32xf32>
      %132 = vector.shape_cast %131 : vector<1x16x32xf32> to vector<16x32xf32>
      %133 = arith.index_cast %arg32 : i32 to index
      %c0_67 = arith.constant 0 : index
      %c0_68 = arith.constant 0 : index
      %134 = vector.load %arg15[%133, %c0_67, %c0_68] : memref<4x32x8xbf16, #tpu.memory_space<vmem>>, vector<1x32x8xbf16>
      %135 = vector.shape_cast %134 : vector<1x32x8xbf16> to vector<32x8xbf16>
      %136 = arith.truncf %132 : vector<16x32xf32> to vector<16x32xbf16>
      %cst_69 = arith.constant dense<0.000000e+00> : vector<16x8xf32>
      %137 = tpu.matmul %136, %135, %cst_69 {dimension_numbers = #tpu.dot_dimension_numbers<[1], [0], [0], [1], [0, 0, 1, 1], [], []>} : vector<16x32xbf16>, vector<32x8xbf16>, vector<16x8xf32> -> vector<16x8xf32>
      %138 = arith.index_cast %arg32 : i32 to index
      %c0_70 = arith.constant 0 : index
      %c0_71 = arith.constant 0 : index
      %139 = vector.load %arg16[%138, %c0_70, %c0_71] : memref<4x1x8xf32, #tpu.memory_space<vmem>>, vector<1x1x8xf32>
      %140 = vector.shape_cast %139 : vector<1x1x8xf32> to vector<1x8xf32>
      %141 = vector.broadcast %140 : vector<1x8xf32> to vector<16x8xf32>
      %142 = arith.addf %137, %141 : vector<16x8xf32>
      %143 = arith.index_cast %arg32 : i32 to index
      %c0_72 = arith.constant 0 : index
      %c0_73 = arith.constant 0 : index
      %144 = vector.load %arg17[%143, %c0_72, %c0_73] : memref<4x32x8xbf16, #tpu.memory_space<vmem>>, vector<1x32x8xbf16>
      %145 = vector.shape_cast %144 : vector<1x32x8xbf16> to vector<32x8xbf16>
      %146 = arith.truncf %132 : vector<16x32xf32> to vector<16x32xbf16>
      %cst_74 = arith.constant dense<0.000000e+00> : vector<16x8xf32>
      %147 = tpu.matmul %146, %145, %cst_74 {dimension_numbers = #tpu.dot_dimension_numbers<[1], [0], [0], [1], [0, 0, 1, 1], [], []>} : vector<16x32xbf16>, vector<32x8xbf16>, vector<16x8xf32> -> vector<16x8xf32>
      %148 = arith.index_cast %arg32 : i32 to index
      %c0_75 = arith.constant 0 : index
      %c0_76 = arith.constant 0 : index
      %149 = vector.load %arg18[%148, %c0_75, %c0_76] : memref<4x1x8xf32, #tpu.memory_space<vmem>>, vector<1x1x8xf32>
      %150 = vector.shape_cast %149 : vector<1x1x8xf32> to vector<1x8xf32>
      %151 = vector.broadcast %150 : vector<1x8xf32> to vector<16x8xf32>
      %152 = arith.addf %147, %151 : vector<16x8xf32>
      %153 = arith.truncf %142 : vector<16x8xf32> to vector<16x8xbf16>
      %cst_77 = arith.constant dense<0.000000e+00> : vector<8x16xf32>
      %154 = tpu.matmul %124, %153, %cst_77 {dimension_numbers = #tpu.dot_dimension_numbers<[1], [1], [0], [0], [0, 0, 1, 0], [], []>} : vector<8x8xbf16>, vector<16x8xbf16>, vector<8x16xf32> -> vector<8x16xf32>
      %cst_78 = arith.constant dense<0xFF800000> : vector<8xf32>
      %155 = vector.multi_reduction <maximumf>, %154, %cst_78 [1] : vector<8x16xf32> to vector<8xf32>
      %156 = vector.shape_cast %155 : vector<8xf32> to vector<8x1xf32>
      %157 = arith.maximumf %125, %156 : vector<8x1xf32>
      %158 = arith.subf %125, %157 : vector<8x1xf32>
      %159 = math.exp %158 : vector<8x1xf32>
      %160 = vector.broadcast %157 : vector<8x1xf32> to vector<8x16xf32>
      %161 = arith.subf %154, %160 : vector<8x16xf32>
      %162 = math.exp %161 : vector<8x16xf32>
      %163 = arith.mulf %159, %126 : vector<8x1xf32>
      %cst_79 = arith.constant dense<0.000000e+00> : vector<8xf32>
      %164 = vector.multi_reduction <add>, %162, %cst_79 [1] : vector<8x16xf32> to vector<8xf32>
      %165 = vector.shape_cast %164 : vector<8xf32> to vector<8x1xf32>
      %166 = arith.addf %163, %165 : vector<8x1xf32>
      %167 = vector.broadcast %159 : vector<8x1xf32> to vector<8x8xf32>
      %168 = arith.mulf %167, %127 : vector<8x8xf32>
      %169 = arith.truncf %162 : vector<8x16xf32> to vector<8x16xbf16>
      %170 = arith.truncf %152 : vector<16x8xf32> to vector<16x8xbf16>
      %cst_80 = arith.constant dense<0.000000e+00> : vector<8x8xf32>
      %171 = tpu.matmul %169, %170, %cst_80 {dimension_numbers = #tpu.dot_dimension_numbers<[1], [0], [0], [1], [0, 0, 1, 1], [], []>} : vector<8x16xbf16>, vector<16x8xbf16>, vector<8x8xf32> -> vector<8x8xf32>
      %172 = arith.addf %168, %171 : vector<8x8xf32>
      %c1_i32_81 = arith.constant 1 : i32
      %173 = tpu.reciprocal %166 {approx = true} : vector<8x1xf32> -> vector<8x1xf32>
      %174 = vector.broadcast %173 : vector<8x1xf32> to vector<8x8xf32>
      %175 = arith.mulf %172, %174 : vector<8x8xf32>
      %176 = arith.index_cast %arg32 : i32 to index
      %c0_82 = arith.constant 0 : index
      %c0_83 = arith.constant 0 : index
      %177 = vector.load %arg19[%176, %c0_82, %c0_83] : memref<4x8x32xbf16, #tpu.memory_space<vmem>>, vector<1x8x32xbf16>
      %178 = vector.shape_cast %177 : vector<1x8x32xbf16> to vector<8x32xbf16>
      %179 = arith.truncf %175 : vector<8x8xf32> to vector<8x8xbf16>
      %cst_84 = arith.constant dense<0.000000e+00> : vector<8x32xf32>
      %180 = tpu.matmul %179, %178, %cst_84 {dimension_numbers = #tpu.dot_dimension_numbers<[1], [0], [0], [1], [0, 0, 1, 1], [], []>} : vector<8x8xbf16>, vector<8x32xbf16>, vector<8x32xf32> -> vector<8x32xf32>
      %181 = arith.addf %arg33, %180 : vector<8x32xf32>
      scf.yield %181 : vector<8x32xf32>
    }
    %c4_i32_18 = arith.constant 4 : i32
    %c0_19 = arith.constant 0 : index
    %c0_20 = arith.constant 0 : index
    %36 = vector.load %arg20[%c0_19, %c0_20] : memref<1x32xf32, #tpu.memory_space<vmem>>, vector<1x32xf32>
    %37 = vector.broadcast %36 : vector<1x32xf32> to vector<8x32xf32>
    %38 = arith.addf %35, %37 : vector<8x32xf32>
    %39 = arith.addf %32, %38 : vector<8x32xf32>
    %c0_21 = arith.constant 0 : index
    %c0_22 = arith.constant 0 : index
    %40 = vector.load %arg23[%c0_21, %c0_22] : memref<1x32xf32, #tpu.memory_space<vmem>>, vector<1x32xf32>
    %c0_23 = arith.constant 0 : index
    %c0_24 = arith.constant 0 : index
    %41 = vector.load %arg24[%c0_23, %c0_24] : memref<1x32xf32, #tpu.memory_space<vmem>>, vector<1x32xf32>
    %cst_25 = arith.constant dense<0.000000e+00> : vector<8xf32>
    %42 = vector.multi_reduction <add>, %39, %cst_25 [1] : vector<8x32xf32> to vector<8xf32>
    %43 = vector.shape_cast %42 : vector<8xf32> to vector<8x1xf32>
    %cst_26 = arith.constant 3.200000e+01 : f32
    %44 = vector.broadcast %cst_26 : f32 to vector<8x1xf32>
    %45 = arith.divf %43, %44 : vector<8x1xf32>
    %46 = vector.broadcast %45 : vector<8x1xf32> to vector<8x32xf32>
    %47 = arith.subf %39, %46 : vector<8x32xf32>
    %48 = arith.mulf %47, %47 : vector<8x32xf32>
    %cst_27 = arith.constant dense<0.000000e+00> : vector<8xf32>
    %49 = vector.multi_reduction <add>, %48, %cst_27 [1] : vector<8x32xf32> to vector<8xf32>
    %50 = vector.shape_cast %49 : vector<8xf32> to vector<8x1xf32>
    %cst_28 = arith.constant 3.200000e+01 : f32
    %51 = vector.broadcast %cst_28 : f32 to vector<8x1xf32>
    %52 = arith.divf %50, %51 : vector<8x1xf32>
    %53 = vector.broadcast %45 : vector<8x1xf32> to vector<8x32xf32>
    %54 = arith.subf %39, %53 : vector<8x32xf32>
    %cst_29 = arith.constant 9.99999974E-6 : f32
    %55 = vector.broadcast %cst_29 : f32 to vector<8x1xf32>
    %56 = arith.addf %52, %55 : vector<8x1xf32>
    %57 = math.rsqrt %56 : vector<8x1xf32>
    %58 = vector.broadcast %57 : vector<8x1xf32> to vector<8x32xf32>
    %59 = arith.mulf %54, %58 : vector<8x32xf32>
    %60 = vector.broadcast %40 : vector<1x32xf32> to vector<8x32xf32>
    %61 = arith.mulf %59, %60 : vector<8x32xf32>
    %62 = vector.broadcast %41 : vector<1x32xf32> to vector<8x32xf32>
    %63 = arith.addf %61, %62 : vector<8x32xf32>
    %c0_30 = arith.constant 0 : index
    %c0_31 = arith.constant 0 : index
    %64 = vector.load %arg27[%c0_30, %c0_31] : memref<32x128xbf16, #tpu.memory_space<vmem>>, vector<32x128xbf16>
    %65 = arith.truncf %63 : vector<8x32xf32> to vector<8x32xbf16>
    %cst_32 = arith.constant dense<0.000000e+00> : vector<8x128xf32>
    %66 = tpu.matmul %65, %64, %cst_32 {dimension_numbers = #tpu.dot_dimension_numbers<[1], [0], [0], [1], [0, 0, 1, 1], [], []>} : vector<8x32xbf16>, vector<32x128xbf16>, vector<8x128xf32> -> vector<8x128xf32>
    %c0_33 = arith.constant 0 : index
    %c0_34 = arith.constant 0 : index
    %67 = vector.load %arg28[%c0_33, %c0_34] : memref<1x128xf32, #tpu.memory_space<vmem>>, vector<1x128xf32>
    %68 = vector.broadcast %67 : vector<1x128xf32> to vector<8x128xf32>
    %69 = arith.addf %66, %68 : vector<8x128xf32>
    %cst_35 = arith.constant 5.000000e-01 : f32
    %70 = vector.broadcast %cst_35 : f32 to vector<8x128xf32>
    %71 = arith.mulf %70, %69 : vector<8x128xf32>
    %cst_36 = arith.constant 0.707106769 : f32
    %72 = vector.broadcast %cst_36 : f32 to vector<8x128xf32>
    %73 = arith.mulf %69, %72 : vector<8x128xf32>
    %74 = math.erf %73 : vector<8x128xf32>
    %cst_37 = arith.constant 1.000000e+00 : f32
    %75 = vector.broadcast %cst_37 : f32 to vector<8x128xf32>
    %76 = arith.addf %75, %74 : vector<8x128xf32>
    %77 = arith.mulf %71, %76 : vector<8x128xf32>
    %c0_38 = arith.constant 0 : index
    %c0_39 = arith.constant 0 : index
    %78 = vector.load %arg29[%c0_38, %c0_39] : memref<128x32xbf16, #tpu.memory_space<vmem>>, vector<128x32xbf16>
    %79 = arith.truncf %77 : vector<8x128xf32> to vector<8x128xbf16>
    %cst_40 = arith.constant dense<0.000000e+00> : vector<8x32xf32>
    %80 = tpu.matmul %79, %78, %cst_40 {dimension_numbers = #tpu.dot_dimension_numbers<[1], [0], [0], [1], [0, 0, 1, 1], [], []>} : vector<8x128xbf16>, vector<128x32xbf16>, vector<8x32xf32> -> vector<8x32xf32>
    %c0_41 = arith.constant 0 : index
    %c0_42 = arith.constant 0 : index
    %81 = vector.load %arg30[%c0_41, %c0_42] : memref<1x32xf32, #tpu.memory_space<vmem>>, vector<1x32xf32>
    %82 = vector.broadcast %81 : vector<1x32xf32> to vector<8x32xf32>
    %83 = arith.addf %80, %82 : vector<8x32xf32>
    %84 = arith.addf %63, %83 : vector<8x32xf32>
    %c0_43 = arith.constant 0 : index
    %c0_44 = arith.constant 0 : index
    %85 = vector.load %arg25[%c0_43, %c0_44] : memref<1x32xf32, #tpu.memory_space<vmem>>, vector<1x32xf32>
    %c0_45 = arith.constant 0 : index
    %c0_46 = arith.constant 0 : index
    %86 = vector.load %arg26[%c0_45, %c0_46] : memref<1x32xf32, #tpu.memory_space<vmem>>, vector<1x32xf32>
    %cst_47 = arith.constant dense<0.000000e+00> : vector<8xf32>
    %87 = vector.multi_reduction <add>, %84, %cst_47 [1] : vector<8x32xf32> to vector<8xf32>
    %88 = vector.shape_cast %87 : vector<8xf32> to vector<8x1xf32>
    %cst_48 = arith.constant 3.200000e+01 : f32
    %89 = vector.broadcast %cst_48 : f32 to vector<8x1xf32>
    %90 = arith.divf %88, %89 : vector<8x1xf32>
    %91 = vector.broadcast %90 : vector<8x1xf32> to vector<8x32xf32>
    %92 = arith.subf %84, %91 : vector<8x32xf32>
    %93 = arith.mulf %92, %92 : vector<8x32xf32>
    %cst_49 = arith.constant dense<0.000000e+00> : vector<8xf32>
    %94 = vector.multi_reduction <add>, %93, %cst_49 [1] : vector<8x32xf32> to vector<8xf32>
    %95 = vector.shape_cast %94 : vector<8xf32> to vector<8x1xf32>
    %cst_50 = arith.constant 3.200000e+01 : f32
    %96 = vector.broadcast %cst_50 : f32 to vector<8x1xf32>
    %97 = arith.divf %95, %96 : vector<8x1xf32>
    %98 = vector.broadcast %90 : vector<8x1xf32> to vector<8x32xf32>
    %99 = arith.subf %84, %98 : vector<8x32xf32>
    %cst_51 = arith.constant 9.99999974E-6 : f32
    %100 = vector.broadcast %cst_51 : f32 to vector<8x1xf32>
    %101 = arith.addf %97, %100 : vector<8x1xf32>
    %102 = math.rsqrt %101 : vector<8x1xf32>
    %103 = vector.broadcast %102 : vector<8x1xf32> to vector<8x32xf32>
    %104 = arith.mulf %99, %103 : vector<8x32xf32>
    %105 = vector.broadcast %85 : vector<1x32xf32> to vector<8x32xf32>
    %106 = arith.mulf %104, %105 : vector<8x32xf32>
    %107 = vector.broadcast %86 : vector<1x32xf32> to vector<8x32xf32>
    %108 = arith.addf %106, %107 : vector<8x32xf32>
    %c0_52 = arith.constant 0 : index
    %c0_53 = arith.constant 0 : index
    %c0_54 = arith.constant 0 : index
    %109 = vector.load %arg31[%c0_52, %c0_53, %c0_54] : memref<1x8x32xf32, #tpu.memory_space<vmem>>, vector<1x8x32xf32>
    %110 = vector.shape_cast %109 : vector<1x8x32xf32> to vector<8x32xf32>
    %111 = vector.shape_cast %108 : vector<8x32xf32> to vector<1x8x32xf32>
    tpu.vector_store %arg31[%c0_52, %c0_53, %c0_54], %111 {strides = array<i32>} : memref<1x8x32xf32, #tpu.memory_space<vmem>>, vector<1x8x32xf32>,
    return
  }
  func.func @transform_0(%arg0: i32, %arg1: i32) -> (i32, i32, i32) {
    %c0_i32 = arith.constant 0 : i32
    %c0_i32_0 = arith.constant 0 : i32
    return %arg0, %arg1, %c0_i32 : i32, i32, i32
  }
  func.func @transform_1(%arg0: i32, %arg1: i32) -> (i32, i32, i32) {
    %c0_i32 = arith.constant 0 : i32
    %c0_i32_0 = arith.constant 0 : i32
    %c0_i32_1 = arith.constant 0 : i32
    return %arg0, %c0_i32, %c0_i32_0 : i32, i32, i32
  }
  func.func @transform_2(%arg0: i32, %arg1: i32) -> (i32, i32, i32) {
    %c0_i32 = arith.constant 0 : i32
    %c0_i32_0 = arith.constant 0 : i32
    %c0_i32_1 = arith.constant 0 : i32
    return %arg0, %c0_i32, %c0_i32_0 : i32, i32, i32
  }
  func.func @transform_3(%arg0: i32, %arg1: i32) -> (i32, i32, i32) {
    %c0_i32 = arith.constant 0 : i32
    %c0_i32_0 = arith.constant 0 : i32
    %c0_i32_1 = arith.constant 0 : i32
    %c0_i32_2 = arith.constant 0 : i32
    return %c0_i32, %c0_i32_0, %c0_i32_1 : i32, i32, i32
  }
  func.func @transform_4(%arg0: i32, %arg1: i32) -> (i32, i32, i32) {
    %c0_i32 = arith.constant 0 : i32
    %c0_i32_0 = arith.constant 0 : i32
    %c0_i32_1 = arith.constant 0 : i32
    %c0_i32_2 = arith.constant 0 : i32
    return %c0_i32, %c0_i32_0, %c0_i32_1 : i32, i32, i32
  }
  func.func @transform_5(%arg0: i32, %arg1: i32) -> (i32, i32, i32) {
    %c0_i32 = arith.constant 0 : i32
    %c0_i32_0 = arith.constant 0 : i32
    %c0_i32_1 = arith.constant 0 : i32
    %c0_i32_2 = arith.constant 0 : i32
    return %c0_i32, %c0_i32_0, %c0_i32_1 : i32, i32, i32
  }
  func.func @transform_6(%arg0: i32, %arg1: i32) -> (i32, i32, i32) {
    %c0_i32 = arith.constant 0 : i32
    %c0_i32_0 = arith.constant 0 : i32
    %c0_i32_1 = arith.constant 0 : i32
    %c0_i32_2 = arith.constant 0 : i32
    return %c0_i32, %c0_i32_0, %c0_i32_1 : i32, i32, i32
  }
  func.func @transform_7(%arg0: i32, %arg1: i32) -> (i32, i32, i32) {
    %c0_i32 = arith.constant 0 : i32
    %c0_i32_0 = arith.constant 0 : i32
    %c0_i32_1 = arith.constant 0 : i32
    %c0_i32_2 = arith.constant 0 : i32
    return %c0_i32, %c0_i32_0, %c0_i32_1 : i32, i32, i32
  }
  func.func @transform_8(%arg0: i32, %arg1: i32) -> (i32, i32, i32) {
    %c0_i32 = arith.constant 0 : i32
    %c0_i32_0 = arith.constant 0 : i32
    %c0_i32_1 = arith.constant 0 : i32
    %c0_i32_2 = arith.constant 0 : i32
    return %c0_i32, %c0_i32_0, %c0_i32_1 : i32, i32, i32
  }
  func.func @transform_9(%arg0: i32, %arg1: i32) -> (i32, i32, i32) {
    %c0_i32 = arith.constant 0 : i32
    %c0_i32_0 = arith.constant 0 : i32
    %c0_i32_1 = arith.constant 0 : i32
    %c0_i32_2 = arith.constant 0 : i32
    return %c0_i32, %c0_i32_0, %c0_i32_1 : i32, i32, i32
  }
  func.func @transform_10(%arg0: i32, %arg1: i32) -> (i32, i32) {
    %c0_i32 = arith.constant 0 : i32
    %c0_i32_0 = arith.constant 0 : i32
    %c0_i32_1 = arith.constant 0 : i32
    return %c0_i32, %c0_i32_0 : i32, i32
  }
  func.func @transform_11(%arg0: i32, %arg1: i32) -> (i32, i32, i32) {
    %c0_i32 = arith.constant 0 : i32
    %c0_i32_0 = arith.constant 0 : i32
    %c0_i32_1 = arith.constant 0 : i32
    %c0_i32_2 = arith.constant 0 : i32
    return %c0_i32, %c0_i32_0, %c0_i32_1 : i32, i32, i32
  }
  func.func @transform_12(%arg0: i32, %arg1: i32) -> (i32, i32, i32) {
    %c0_i32 = arith.constant 0 : i32
    %c0_i32_0 = arith.constant 0 : i32
    %c0_i32_1 = arith.constant 0 : i32
    %c0_i32_2 = arith.constant 0 : i32
    return %c0_i32, %c0_i32_0, %c0_i32_1 : i32, i32, i32
  }
  func.func @transform_13(%arg0: i32, %arg1: i32) -> (i32, i32, i32) {
    %c0_i32 = arith.constant 0 : i32
    %c0_i32_0 = arith.constant 0 : i32
    %c0_i32_1 = arith.constant 0 : i32
    %c0_i32_2 = arith.constant 0 : i32
    return %c0_i32, %c0_i32_0, %c0_i32_1 : i32, i32, i32
  }
  func.func @transform_14(%arg0: i32, %arg1: i32) -> (i32, i32, i32) {
    %c0_i32 = arith.constant 0 : i32
    %c0_i32_0 = arith.constant 0 : i32
    %c0_i32_1 = arith.constant 0 : i32
    %c0_i32_2 = arith.constant 0 : i32
    return %c0_i32, %c0_i32_0, %c0_i32_1 : i32, i32, i32
  }
  func.func @transform_15(%arg0: i32, %arg1: i32) -> (i32, i32, i32) {
    %c0_i32 = arith.constant 0 : i32
    %c0_i32_0 = arith.constant 0 : i32
    %c0_i32_1 = arith.constant 0 : i32
    %c0_i32_2 = arith.constant 0 : i32
    return %c0_i32, %c0_i32_0, %c0_i32_1 : i32, i32, i32
  }
  func.func @transform_16(%arg0: i32, %arg1: i32) -> (i32, i32, i32) {
    %c0_i32 = arith.constant 0 : i32
    %c0_i32_0 = arith.constant 0 : i32
    %c0_i32_1 = arith.constant 0 : i32
    %c0_i32_2 = arith.constant 0 : i32
    return %c0_i32, %c0_i32_0, %c0_i32_1 : i32, i32, i32
  }
  func.func @transform_17(%arg0: i32, %arg1: i32) -> (i32, i32, i32) {
    %c0_i32 = arith.constant 0 : i32
    %c0_i32_0 = arith.constant 0 : i32
    %c0_i32_1 = arith.constant 0 : i32
    %c0_i32_2 = arith.constant 0 : i32
    return %c0_i32, %c0_i32_0, %c0_i32_1 : i32, i32, i32
  }
  func.func @transform_18(%arg0: i32, %arg1: i32) -> (i32, i32) {
    %c0_i32 = arith.constant 0 : i32
    %c0_i32_0 = arith.constant 0 : i32
    %c0_i32_1 = arith.constant 0 : i32
    return %c0_i32, %c0_i32_0 : i32, i32
  }
  func.func @transform_19(%arg0: i32, %arg1: i32) -> (i32, i32) {
    %c0_i32 = arith.constant 0 : i32
    %c0_i32_0 = arith.constant 0 : i32
    %c0_i32_1 = arith.constant 0 : i32
    return %c0_i32, %c0_i32_0 : i32, i32
  }
  func.func @transform_20(%arg0: i32, %arg1: i32) -> (i32, i32) {
    %c0_i32 = arith.constant 0 : i32
    %c0_i32_0 = arith.constant 0 : i32
    %c0_i32_1 = arith.constant 0 : i32
    return %c0_i32, %c0_i32_0 : i32, i32
  }
  func.func @transform_21(%arg0: i32, %arg1: i32) -> (i32, i32) {
    %c0_i32 = arith.constant 0 : i32
    %c0_i32_0 = arith.constant 0 : i32
    %c0_i32_1 = arith.constant 0 : i32
    return %c0_i32, %c0_i32_0 : i32, i32
  }
  func.func @transform_22(%arg0: i32, %arg1: i32) -> (i32, i32) {
    %c0_i32 = arith.constant 0 : i32
    %c0_i32_0 = arith.constant 0 : i32
    %c0_i32_1 = arith.constant 0 : i32
    return %c0_i32, %c0_i32_0 : i32, i32
  }
  func.func @transform_23(%arg0: i32, %arg1: i32) -> (i32, i32) {
    %c0_i32 = arith.constant 0 : i32
    %c0_i32_0 = arith.constant 0 : i32
    %c0_i32_1 = arith.constant 0 : i32
    return %c0_i32, %c0_i32_0 : i32, i32
  }
  func.func @transform_24(%arg0: i32, %arg1: i32) -> (i32, i32) {
    %c0_i32 = arith.constant 0 : i32
    %c0_i32_0 = arith.constant 0 : i32
    %c0_i32_1 = arith.constant 0 : i32
    return %c0_i32, %c0_i32_0 : i32, i32
  }
  func.func @transform_25(%arg0: i32, %arg1: i32) -> (i32, i32) {
    %c0_i32 = arith.constant 0 : i32
    %c0_i32_0 = arith.constant 0 : i32
    %c0_i32_1 = arith.constant 0 : i32
    return %c0_i32, %c0_i32_0 : i32, i32
  }
  func.func @transform_26(%arg0: i32, %arg1: i32) -> (i32, i32) {
    %c0_i32 = arith.constant 0 : i32
    %c0_i32_0 = arith.constant 0 : i32
    %c0_i32_1 = arith.constant 0 : i32
    return %c0_i32, %c0_i32_0 : i32, i32
  }
  func.func @transform_27(%arg0: i32, %arg1: i32) -> (i32, i32) {
    %c0_i32 = arith.constant 0 : i32
    %c0_i32_0 = arith.constant 0 : i32
    %c0_i32_1 = arith.constant 0 : i32
    return %c0_i32, %c0_i32_0 : i32, i32
  }
  func.func @transform_28(%arg0: i32, %arg1: i32) -> (i32, i32) {
    %c0_i32 = arith.constant 0 : i32
    %c0_i32_0 = arith.constant 0 : i32
    %c0_i32_1 = arith.constant 0 : i32
    return %c0_i32, %c0_i32_0 : i32, i32
  }
  func.func @transform_29(%arg0: i32, %arg1: i32) -> (i32, i32, i32) {
    %c0_i32 = arith.constant 0 : i32
    %c0_i32_0 = arith.constant 0 : i32
    return %arg0, %arg1, %c0_i32 : i32, i32, i32
  }
}

</mosaic_0001>

<llo_original>
// kernel: tpu_custom_call.1
$region0: #{tpu_custom_call.1}
  #allocation0 [shape = 'u32[]', space=smem, size = 0x4, offset = 0x4, fixed_abs, tag = 'smem constant byte address 0x4 - core index']
  #allocation1 [shape = 'u32[72,128]{1,0:T(1,128)}', space=vmem, size = 0x9000, scoped, tag = 'internal scratch']
  %s0 = inlined_call_operand.smem [shape: u32[30], index: -1, kind: input, shape index: {}]
  %s1 = sld [smem:[%s0]]
  %s2 = scalar_lea.smem %s0, 1
  %s3 = sld [smem:[%s2]]
  %s4 = scalar_lea.smem %s0, 2
  %s5 = sld [smem:[%s4]]
  %s6 = scalar_lea.smem %s0, 3
  %s7 = sld [smem:[%s6]]
  %s8 = scalar_lea.smem %s0, 4
  %s9 = sld [smem:[%s8]]
  %s10 = scalar_lea.smem %s0, 5
  %s11 = sld [smem:[%s10]]
  %s12 = scalar_lea.smem %s0, 6
  %s13 = sld [smem:[%s12]]
  %s14 = scalar_lea.smem %s0, 7
  %s15 = sld [smem:[%s14]]
  %s16 = scalar_lea.smem %s0, 8
  %s17 = sld [smem:[%s16]]
  %s18 = scalar_lea.smem %s0, 9
  %s19 = sld [smem:[%s18]]
  %s20 = scalar_lea.smem %s0, 10
  %s21 = sld [smem:[%s20]]
  %s22 = scalar_lea.smem %s0, 11
  %s23 = sld [smem:[%s22]]
  %s24 = scalar_lea.smem %s0, 12
  %s25 = sld [smem:[%s24]]
  %s26 = scalar_lea.smem %s0, 13
  %s27 = sld [smem:[%s26]]
  %s28 = scalar_lea.smem %s0, 14
  %s29 = sld [smem:[%s28]]
  %s30 = scalar_lea.smem %s0, 15
  %s31 = sld [smem:[%s30]]
  %s32 = scalar_lea.smem %s0, 16
  %s33 = sld [smem:[%s32]]
  %s34 = scalar_lea.smem %s0, 17
  %s35 = sld [smem:[%s34]]
  %s36 = scalar_lea.smem %s0, 18
  %s37 = sld [smem:[%s36]]
  %s38 = scalar_lea.smem %s0, 19
  %s39 = sld [smem:[%s38]]
  %s40 = scalar_lea.smem %s0, 20
  %s41 = sld [smem:[%s40]]
  %s42 = scalar_lea.smem %s0, 21
  %s43 = sld [smem:[%s42]]
  %s44 = scalar_lea.smem %s0, 22
  %s45 = sld [smem:[%s44]]
  %s46 = scalar_lea.smem %s0, 23
  %s47 = sld [smem:[%s46]]
  %s48 = scalar_lea.smem %s0, 24
  %s49 = sld [smem:[%s48]]
  %s50 = scalar_lea.smem %s0, 25
  %s51 = sld [smem:[%s50]]
  %s52 = scalar_lea.smem %s0, 26
  %s53 = sld [smem:[%s52]]
  %s54 = scalar_lea.smem %s0, 27
  %s55 = sld [smem:[%s54]]
  %s56 = scalar_lea.smem %s0, 28
  %s57 = sld [smem:[%s56]]
  %s58 = scalar_lea.smem %s0, 29
  %s59 = sld [smem:[%s58]]
  %s60 = sld [smem:[#allocation0]]
  $region163: #{tpu_custom_call.1} parent=0
    _
  %s62 = ssub.s32 1, %s60
  %s63 = scalar_select 0, %s62, %s60
  $region1: #{tpu_custom_call.1} parent=0
    #allocation2 [shape = 'u8[8192]{0}', space=vmem, size = 0x2000, scoped, tag = 'output window, operand 0']
    #allocation3 [shape = 's32[2]{0}', space=sflag, size = 0x8, scoped, tag = 'scoped memory for tpu_custom_call.1']
    %64 = vsyncpa [#allocation3], 0
    %s65 = scalar_lea.sflag [#allocation3], 1
    %66 = vsyncpa %s65, 0
    loop: start=0, step=1, limit=4
    $region2: #{tpu_custom_call.1} parent=1 // loop_pre_header
      _
    $region3: #{tpu_custom_call.1} parent=1 // loop_header
      %s68 = sphi 0, %s72
      %p69 = scmp.ge.s32.totalorder %s68, 4
      %s75 = sphi 0, %s87
      %s76 = sphi 0, %s83
      %s77 = sphi 0, %s75
      %s78 = sphi 0, %s76
      %s79 = sphi 0, %s77
      %s80 = sphi 0, %s78
      %s92 = sphi 0, %s94
      %s95 = sphi 0, %s92
      %s96 = sphi 0, %s95
      %s112 = sphi 0, %s96
      %s118 = sphi 0, %s120
      %s121 = sphi 0, %s118
      %s122 = sphi 0, %s121
      %s138 = sphi 0, %s122
      %s144 = sphi 0, %s146
      %s147 = sphi 0, %s144
      %s148 = sphi 0, %s147
      %s164 = sphi 0, %s148
      %s168 = sphi 0, %s168
      %s170 = sphi 0, %s168
      %s171 = sphi 0, %s170
      %s185 = sphi 0, %s171
      %s189 = sphi 0, %s189
      %s191 = sphi 0, %s189
      %s192 = sphi 0, %s191
      %s206 = sphi 0, %s192
      %s210 = sphi 0, %s210
      %s212 = sphi 0, %s210
      %s213 = sphi 0, %s212
      %s227 = sphi 0, %s213
      %s231 = sphi 0, %s231
      %s233 = sphi 0, %s231
      %s234 = sphi 0, %s233
      %s248 = sphi 0, %s234
      %s252 = sphi 0, %s252
      %s254 = sphi 0, %s252
      %s255 = sphi 0, %s254
      %s269 = sphi 0, %s255
      %s273 = sphi 0, %s273
      %s275 = sphi 0, %s273
      %s276 = sphi 0, %s275
      %s290 = sphi 0, %s276
      %s294 = sphi 0, %s294
      %s296 = sphi 0, %s294
      %s297 = sphi 0, %s296
      %s311 = sphi 0, %s297
      %s315 = sphi 0, %s315
      %s317 = sphi 0, %s315
      %s318 = sphi 0, %s317
      %s332 = sphi 0, %s318
      %s336 = sphi 0, %s336
      %s338 = sphi 0, %s336
      %s339 = sphi 0, %s338
      %s353 = sphi 0, %s339
      %s357 = sphi 0, %s357
      %s359 = sphi 0, %s357
      %s360 = sphi 0, %s359
      %s374 = sphi 0, %s360
      %s378 = sphi 0, %s378
      %s380 = sphi 0, %s378
      %s381 = sphi 0, %s380
      %s395 = sphi 0, %s381
      %s399 = sphi 0, %s399
      %s401 = sphi 0, %s399
      %s402 = sphi 0, %s401
      %s416 = sphi 0, %s402
      %s420 = sphi 0, %s420
      %s422 = sphi 0, %s420
      %s423 = sphi 0, %s422
      %s437 = sphi 0, %s423
      %s441 = sphi 0, %s441
      %s443 = sphi 0, %s441
      %s444 = sphi 0, %s443
      %s458 = sphi 0, %s444
      %s462 = sphi 0, %s462
      %s464 = sphi 0, %s462
      %s465 = sphi 0, %s464
      %s479 = sphi 0, %s465
      %s483 = sphi 0, %s483
      %s485 = sphi 0, %s483
      %s486 = sphi 0, %s485
      %s500 = sphi 0, %s486
      %s504 = sphi 0, %s504
      %s506 = sphi 0, %s504
      %s507 = sphi 0, %s506
      %s521 = sphi 0, %s507
      %s525 = sphi 0, %s525
      %s527 = sphi 0, %s525
      %s528 = sphi 0, %s527
      %s542 = sphi 0, %s528
      %s546 = sphi 0, %s546
      %s548 = sphi 0, %s546
      %s549 = sphi 0, %s548
      %s563 = sphi 0, %s549
      %s567 = sphi 0, %s567
      %s569 = sphi 0, %s567
      %s570 = sphi 0, %s569
      %s584 = sphi 0, %s570
      %s588 = sphi 0, %s588
      %s590 = sphi 0, %s588
      %s591 = sphi 0, %s590
      %s605 = sphi 0, %s591
      %s609 = sphi 0, %s609
      %s611 = sphi 0, %s609
      %s612 = sphi 0, %s611
      %s626 = sphi 0, %s612
      %s630 = sphi 0, %s630
      %s632 = sphi 0, %s630
      %s633 = sphi 0, %s632
      %s647 = sphi 0, %s633
      %s651 = sphi 0, %s651
      %s653 = sphi 0, %s651
      %s654 = sphi 0, %s653
      %s668 = sphi 0, %s654
      %s672 = sphi 0, %s672
      %s674 = sphi 0, %s672
      %s675 = sphi 0, %s674
      %s689 = sphi 0, %s675
      %s693 = sphi 0, %s693
      %s695 = sphi 0, %s693
      %s696 = sphi 0, %s695
      %s710 = sphi 0, %s696
      %s718 = sphi 0, %s720
      %s721 = sphi 0, %s718
      %s722 = sphi 0, %s721
      %s738 = sphi 0, %s722
    $region4: #{tpu_custom_call.1} parent=1 // loop_header_branch
      %71 = sbr.rel (%p69) target = $region8
    $region5: #{tpu_custom_call.1} parent=1 // loop_body
      %s73 = ssub.s32 %s68, 1
      %s74 = ssub.s32 %s68, 2
      %s81 = sadd.s32 1, %s76
      %p82 = scmp.ge.s32.totalorder %s81, 1
      %s83 = scalar_select %p82, 0, %s81
      %s84 = sadd.s32 1, %s75
      %s85 = scalar_select %p82, %s84, %s75
      %p86 = scmp.ge.s32.totalorder %s85, 2
      %s87 = scalar_select %p86, 0, %s85
      %s88 = ssub.s32 %s75, %s87
      %s89 = ssub.s32 %s76, %s83
      %s90 = sor.u32 %s88, %s89
      %p91 = scmp.eq.s32.totalorder %s90, 0
      %s93 = sadd.s32 %s92, 1
      %s94 = scalar_select %p91, %s92, %s93
      %p97 = pneg %p91
      %p98 = scmp.eq.s32.totalorder %s68, 1
      %p99 = por %p97, %p98
      %p100 = scmp.ne.s32.totalorder %s92, %s95
      %p101 = scmp.eq.s32.totalorder %s68, 0
      %p102 = por %p100, %p101
      %p103 = scmp.ne.s32.totalorder %s92, %s95
      %p104 = scmp.eq.s32.totalorder %s73, 1
      %p105 = por %p103, %p104
      %p106 = scmp.ne.s32.totalorder %s95, %s96
      %p107 = scmp.eq.s32.totalorder %s73, 0
      %p108 = por %p106, %p107
      %p109 = scmp.ne.s32.totalorder %s95, %s96
      %p110 = scmp.eq.s32.totalorder %s74, 1
      %p111 = por %p109, %p110
      %p113 = scmp.ne.s32.totalorder %s96, %s112
      %p114 = scmp.eq.s32.totalorder %s74, 0
      %p115 = por %p113, %p114
      %s116 = ssub.s32 %s75, %s87
      %p117 = scmp.eq.s32.totalorder %s116, 0
      %s119 = sadd.s32 %s118, 1
      %s120 = scalar_select %p117, %s118, %s119
      %p123 = pneg %p117
      %p124 = scmp.eq.s32.totalorder %s68, 1
      %p125 = por %p123, %p124
      %p126 = scmp.ne.s32.totalorder %s118, %s121
      %p127 = scmp.eq.s32.totalorder %s68, 0
      %p128 = por %p126, %p127
      %p129 = scmp.ne.s32.totalorder %s118, %s121
      %p130 = scmp.eq.s32.totalorder %s73, 1
      %p131 = por %p129, %p130
      %p132 = scmp.ne.s32.totalorder %s121, %s122
      %p133 = scmp.eq.s32.totalorder %s73, 0
      %p134 = por %p132, %p133
      %p135 = scmp.ne.s32.totalorder %s121, %s122
      %p136 = scmp.eq.s32.totalorder %s74, 1
      %p137 = por %p135, %p136
      %p139 = scmp.ne.s32.totalorder %s122, %s138
      %p140 = scmp.eq.s32.totalorder %s74, 0
      %p141 = por %p139, %p140
      %s142 = ssub.s32 %s75, %s87
      %p143 = scmp.eq.s32.totalorder %s142, 0
      %s145 = sadd.s32 %s144, 1
      %s146 = scalar_select %p143, %s144, %s145
      %p149 = pneg %p143
      %p150 = scmp.eq.s32.totalorder %s68, 1
      %p151 = por %p149, %p150
      %p152 = scmp.ne.s32.totalorder %s144, %s147
      %p153 = scmp.eq.s32.totalorder %s68, 0
      %p154 = por %p152, %p153
      %p155 = scmp.ne.s32.totalorder %s144, %s147
      %p156 = scmp.eq.s32.totalorder %s73, 1
      %p157 = por %p155, %p156
      %p158 = scmp.ne.s32.totalorder %s147, %s148
      %p159 = scmp.eq.s32.totalorder %s73, 0
      %p160 = por %p158, %p159
      %p161 = scmp.ne.s32.totalorder %s147, %s148
      %p162 = scmp.eq.s32.totalorder %s74, 1
      %p163 = por %p161, %p162
      %p165 = scmp.ne.s32.totalorder %s148, %s164
      %p166 = scmp.eq.s32.totalorder %s74, 0
      %p167 = por %p165, %p166
      %s169 = sadd.s32 %s168, 1
      %p172 = scmp.eq.s32.totalorder %s68, 1
      %p173 = scmp.ne.s32.totalorder %s168, %s170
      %p174 = scmp.eq.s32.totalorder %s68, 0
      %p175 = por %p173, %p174
      %p176 = scmp.ne.s32.totalorder %s168, %s170
      %p177 = scmp.eq.s32.totalorder %s73, 1
      %p178 = por %p176, %p177
      %p179 = scmp.ne.s32.totalorder %s170, %s171
      %p180 = scmp.eq.s32.totalorder %s73, 0
      %p181 = por %p179, %p180
      %p182 = scmp.ne.s32.totalorder %s170, %s171
      %p183 = scmp.eq.s32.totalorder %s74, 1
      %p184 = por %p182, %p183
      %p186 = scmp.ne.s32.totalorder %s171, %s185
      %p187 = scmp.eq.s32.totalorder %s74, 0
      %p188 = por %p186, %p187
      %s190 = sadd.s32 %s189, 1
      %p193 = scmp.eq.s32.totalorder %s68, 1
      %p194 = scmp.ne.s32.totalorder %s189, %s191
      %p195 = scmp.eq.s32.totalorder %s68, 0
      %p196 = por %p194, %p195
      %p197 = scmp.ne.s32.totalorder %s189, %s191
      %p198 = scmp.eq.s32.totalorder %s73, 1
      %p199 = por %p197, %p198
      %p200 = scmp.ne.s32.totalorder %s191, %s192
      %p201 = scmp.eq.s32.totalorder %s73, 0
      %p202 = por %p200, %p201
      %p203 = scmp.ne.s32.totalorder %s191, %s192
      %p204 = scmp.eq.s32.totalorder %s74, 1
      %p205 = por %p203, %p204
      %p207 = scmp.ne.s32.totalorder %s192, %s206
      %p208 = scmp.eq.s32.totalorder %s74, 0
      %p209 = por %p207, %p208
      %s211 = sadd.s32 %s210, 1
      %p214 = scmp.eq.s32.totalorder %s68, 1
      %p215 = scmp.ne.s32.totalorder %s210, %s212
      %p216 = scmp.eq.s32.totalorder %s68, 0
      %p217 = por %p215, %p216
      %p218 = scmp.ne.s32.totalorder %s210, %s212
      %p219 = scmp.eq.s32.totalorder %s73, 1
      %p220 = por %p218, %p219
      %p221 = scmp.ne.s32.totalorder %s212, %s213
      %p222 = scmp.eq.s32.totalorder %s73, 0
      %p223 = por %p221, %p222
      %p224 = scmp.ne.s32.totalorder %s212, %s213
      %p225 = scmp.eq.s32.totalorder %s74, 1
      %p226 = por %p224, %p225
      %p228 = scmp.ne.s32.totalorder %s213, %s227
      %p229 = scmp.eq.s32.totalorder %s74, 0
      %p230 = por %p228, %p229
      %s232 = sadd.s32 %s231, 1
      %p235 = scmp.eq.s32.totalorder %s68, 1
      %p236 = scmp.ne.s32.totalorder %s231, %s233
      %p237 = scmp.eq.s32.totalorder %s68, 0
      %p238 = por %p236, %p237
      %p239 = scmp.ne.s32.totalorder %s231, %s233
      %p240 = scmp.eq.s32.totalorder %s73, 1
      %p241 = por %p239, %p240
      %p242 = scmp.ne.s32.totalorder %s233, %s234
      %p243 = scmp.eq.s32.totalorder %s73, 0
      %p244 = por %p242, %p243
      %p245 = scmp.ne.s32.totalorder %s233, %s234
      %p246 = scmp.eq.s32.totalorder %s74, 1
      %p247 = por %p245, %p246
      %p249 = scmp.ne.s32.totalorder %s234, %s248
      %p250 = scmp.eq.s32.totalorder %s74, 0
      %p251 = por %p249, %p250
      %s253 = sadd.s32 %s252, 1
      %p256 = scmp.eq.s32.totalorder %s68, 1
      %p257 = scmp.ne.s32.totalorder %s252, %s254
      %p258 = scmp.eq.s32.totalorder %s68, 0
      %p259 = por %p257, %p258
      %p260 = scmp.ne.s32.totalorder %s252, %s254
      %p261 = scmp.eq.s32.totalorder %s73, 1
      %p262 = por %p260, %p261
      %p263 = scmp.ne.s32.totalorder %s254, %s255
      %p264 = scmp.eq.s32.totalorder %s73, 0
      %p265 = por %p263, %p264
      %p266 = scmp.ne.s32.totalorder %s254, %s255
      %p267 = scmp.eq.s32.totalorder %s74, 1
      %p268 = por %p266, %p267
      %p270 = scmp.ne.s32.totalorder %s255, %s269
      %p271 = scmp.eq.s32.totalorder %s74, 0
      %p272 = por %p270, %p271
      %s274 = sadd.s32 %s273, 1
      %p277 = scmp.eq.s32.totalorder %s68, 1
      %p278 = scmp.ne.s32.totalorder %s273, %s275
      %p279 = scmp.eq.s32.totalorder %s68, 0
      %p280 = por %p278, %p279
      %p281 = scmp.ne.s32.totalorder %s273, %s275
      %p282 = scmp.eq.s32.totalorder %s73, 1
      %p283 = por %p281, %p282
      %p284 = scmp.ne.s32.totalorder %s275, %s276
      %p285 = scmp.eq.s32.totalorder %s73, 0
      %p286 = por %p284, %p285
      %p287 = scmp.ne.s32.totalorder %s275, %s276
      %p288 = scmp.eq.s32.totalorder %s74, 1
      %p289 = por %p287, %p288
      %p291 = scmp.ne.s32.totalorder %s276, %s290
      %p292 = scmp.eq.s32.totalorder %s74, 0
      %p293 = por %p291, %p292
      %s295 = sadd.s32 %s294, 1
      %p298 = scmp.eq.s32.totalorder %s68, 1
      %p299 = scmp.ne.s32.totalorder %s294, %s296
      %p300 = scmp.eq.s32.totalorder %s68, 0
      %p301 = por %p299, %p300
      %p302 = scmp.ne.s32.totalorder %s294, %s296
      %p303 = scmp.eq.s32.totalorder %s73, 1
      %p304 = por %p302, %p303
      %p305 = scmp.ne.s32.totalorder %s296, %s297
      %p306 = scmp.eq.s32.totalorder %s73, 0
      %p307 = por %p305, %p306
      %p308 = scmp.ne.s32.totalorder %s296, %s297
      %p309 = scmp.eq.s32.totalorder %s74, 1
      %p310 = por %p308, %p309
      %p312 = scmp.ne.s32.totalorder %s297, %s311
      %p313 = scmp.eq.s32.totalorder %s74, 0
      %p314 = por %p312, %p313
      %s316 = sadd.s32 %s315, 1
      %p319 = scmp.eq.s32.totalorder %s68, 1
      %p320 = scmp.ne.s32.totalorder %s315, %s317
      %p321 = scmp.eq.s32.totalorder %s68, 0
      %p322 = por %p320, %p321
      %p323 = scmp.ne.s32.totalorder %s315, %s317
      %p324 = scmp.eq.s32.totalorder %s73, 1
      %p325 = por %p323, %p324
      %p326 = scmp.ne.s32.totalorder %s317, %s318
      %p327 = scmp.eq.s32.totalorder %s73, 0
      %p328 = por %p326, %p327
      %p329 = scmp.ne.s32.totalorder %s317, %s318
      %p330 = scmp.eq.s32.totalorder %s74, 1
      %p331 = por %p329, %p330
      %p333 = scmp.ne.s32.totalorder %s318, %s332
      %p334 = scmp.eq.s32.totalorder %s74, 0
      %p335 = por %p333, %p334
      %s337 = sadd.s32 %s336, 1
      %p340 = scmp.eq.s32.totalorder %s68, 1
      %p341 = scmp.ne.s32.totalorder %s336, %s338
      %p342 = scmp.eq.s32.totalorder %s68, 0
      %p343 = por %p341, %p342
      %p344 = scmp.ne.s32.totalorder %s336, %s338
      %p345 = scmp.eq.s32.totalorder %s73, 1
      %p346 = por %p344, %p345
      %p347 = scmp.ne.s32.totalorder %s338, %s339
      %p348 = scmp.eq.s32.totalorder %s73, 0
      %p349 = por %p347, %p348
      %p350 = scmp.ne.s32.totalorder %s338, %s339
      %p351 = scmp.eq.s32.totalorder %s74, 1
      %p352 = por %p350, %p351
      %p354 = scmp.ne.s32.totalorder %s339, %s353
      %p355 = scmp.eq.s32.totalorder %s74, 0
      %p356 = por %p354, %p355
      %s358 = sadd.s32 %s357, 1
      %p361 = scmp.eq.s32.totalorder %s68, 1
      %p362 = scmp.ne.s32.totalorder %s357, %s359
      %p363 = scmp.eq.s32.totalorder %s68, 0
      %p364 = por %p362, %p363
      %p365 = scmp.ne.s32.totalorder %s357, %s359
      %p366 = scmp.eq.s32.totalorder %s73, 1
      %p367 = por %p365, %p366
      %p368 = scmp.ne.s32.totalorder %s359, %s360
      %p369 = scmp.eq.s32.totalorder %s73, 0
      %p370 = por %p368, %p369
      %p371 = scmp.ne.s32.totalorder %s359, %s360
      %p372 = scmp.eq.s32.totalorder %s74, 1
      %p373 = por %p371, %p372
      %p375 = scmp.ne.s32.totalorder %s360, %s374
      %p376 = scmp.eq.s32.totalorder %s74, 0
      %p377 = por %p375, %p376
      %s379 = sadd.s32 %s378, 1
      %p382 = scmp.eq.s32.totalorder %s68, 1
      %p383 = scmp.ne.s32.totalorder %s378, %s380
      %p384 = scmp.eq.s32.totalorder %s68, 0
      %p385 = por %p383, %p384
      %p386 = scmp.ne.s32.totalorder %s378, %s380
      %p387 = scmp.eq.s32.totalorder %s73, 1
      %p388 = por %p386, %p387
      %p389 = scmp.ne.s32.totalorder %s380, %s381
      %p390 = scmp.eq.s32.totalorder %s73, 0
      %p391 = por %p389, %p390
      %p392 = scmp.ne.s32.totalorder %s380, %s381
      %p393 = scmp.eq.s32.totalorder %s74, 1
      %p394 = por %p392, %p393
      %p396 = scmp.ne.s32.totalorder %s381, %s395
      %p397 = scmp.eq.s32.totalorder %s74, 0
      %p398 = por %p396, %p397
      %s400 = sadd.s32 %s399, 1
      %p403 = scmp.eq.s32.totalorder %s68, 1
      %p404 = scmp.ne.s32.totalorder %s399, %s401
      %p405 = scmp.eq.s32.totalorder %s68, 0
      %p406 = por %p404, %p405
      %p407 = scmp.ne.s32.totalorder %s399, %s401
      %p408 = scmp.eq.s32.totalorder %s73, 1
      %p409 = por %p407, %p408
      %p410 = scmp.ne.s32.totalorder %s401, %s402
      %p411 = scmp.eq.s32.totalorder %s73, 0
      %p412 = por %p410, %p411
      %p413 = scmp.ne.s32.totalorder %s401, %s402
      %p414 = scmp.eq.s32.totalorder %s74, 1
      %p415 = por %p413, %p414
      %p417 = scmp.ne.s32.totalorder %s402, %s416
      %p418 = scmp.eq.s32.totalorder %s74, 0
      %p419 = por %p417, %p418
      %s421 = sadd.s32 %s420, 1
      %p424 = scmp.eq.s32.totalorder %s68, 1
      %p425 = scmp.ne.s32.totalorder %s420, %s422
      %p426 = scmp.eq.s32.totalorder %s68, 0
      %p427 = por %p425, %p426
      %p428 = scmp.ne.s32.totalorder %s420, %s422
      %p429 = scmp.eq.s32.totalorder %s73, 1
      %p430 = por %p428, %p429
      %p431 = scmp.ne.s32.totalorder %s422, %s423
      %p432 = scmp.eq.s32.totalorder %s73, 0
      %p433 = por %p431, %p432
      %p434 = scmp.ne.s32.totalorder %s422, %s423
      %p435 = scmp.eq.s32.totalorder %s74, 1
      %p436 = por %p434, %p435
      %p438 = scmp.ne.s32.totalorder %s423, %s437
      %p439 = scmp.eq.s32.totalorder %s74, 0
      %p440 = por %p438, %p439
      %s442 = sadd.s32 %s441, 1
      %p445 = scmp.eq.s32.totalorder %s68, 1
      %p446 = scmp.ne.s32.totalorder %s441, %s443
      %p447 = scmp.eq.s32.totalorder %s68, 0
      %p448 = por %p446, %p447
      %p449 = scmp.ne.s32.totalorder %s441, %s443
      %p450 = scmp.eq.s32.totalorder %s73, 1
      %p451 = por %p449, %p450
      %p452 = scmp.ne.s32.totalorder %s443, %s444
      %p453 = scmp.eq.s32.totalorder %s73, 0
      %p454 = por %p452, %p453
      %p455 = scmp.ne.s32.totalorder %s443, %s444
      %p456 = scmp.eq.s32.totalorder %s74, 1
      %p457 = por %p455, %p456
      %p459 = scmp.ne.s32.totalorder %s444, %s458
      %p460 = scmp.eq.s32.totalorder %s74, 0
      %p461 = por %p459, %p460
      %s463 = sadd.s32 %s462, 1
      %p466 = scmp.eq.s32.totalorder %s68, 1
      %p467 = scmp.ne.s32.totalorder %s462, %s464
      %p468 = scmp.eq.s32.totalorder %s68, 0
      %p469 = por %p467, %p468
      %p470 = scmp.ne.s32.totalorder %s462, %s464
      %p471 = scmp.eq.s32.totalorder %s73, 1
      %p472 = por %p470, %p471
      %p473 = scmp.ne.s32.totalorder %s464, %s465
      %p474 = scmp.eq.s32.totalorder %s73, 0
      %p475 = por %p473, %p474
      %p476 = scmp.ne.s32.totalorder %s464, %s465
      %p477 = scmp.eq.s32.totalorder %s74, 1
      %p478 = por %p476, %p477
      %p480 = scmp.ne.s32.totalorder %s465, %s479
      %p481 = scmp.eq.s32.totalorder %s74, 0
      %p482 = por %p480, %p481
      %s484 = sadd.s32 %s483, 1
      %p487 = scmp.eq.s32.totalorder %s68, 1
      %p488 = scmp.ne.s32.totalorder %s483, %s485
      %p489 = scmp.eq.s32.totalorder %s68, 0
      %p490 = por %p488, %p489
      %p491 = scmp.ne.s32.totalorder %s483, %s485
      %p492 = scmp.eq.s32.totalorder %s73, 1
      %p493 = por %p491, %p492
      %p494 = scmp.ne.s32.totalorder %s485, %s486
      %p495 = scmp.eq.s32.totalorder %s73, 0
      %p496 = por %p494, %p495
      %p497 = scmp.ne.s32.totalorder %s485, %s486
      %p498 = scmp.eq.s32.totalorder %s74, 1
      %p499 = por %p497, %p498
      %p501 = scmp.ne.s32.totalorder %s486, %s500
      %p502 = scmp.eq.s32.totalorder %s74, 0
      %p503 = por %p501, %p502
      %s505 = sadd.s32 %s504, 1
      %p508 = scmp.eq.s32.totalorder %s68, 1
      %p509 = scmp.ne.s32.totalorder %s504, %s506
      %p510 = scmp.eq.s32.totalorder %s68, 0
      %p511 = por %p509, %p510
      %p512 = scmp.ne.s32.totalorder %s504, %s506
      %p513 = scmp.eq.s32.totalorder %s73, 1
      %p514 = por %p512, %p513
      %p515 = scmp.ne.s32.totalorder %s506, %s507
      %p516 = scmp.eq.s32.totalorder %s73, 0
      %p517 = por %p515, %p516
      %p518 = scmp.ne.s32.totalorder %s506, %s507
      %p519 = scmp.eq.s32.totalorder %s74, 1
      %p520 = por %p518, %p519
      %p522 = scmp.ne.s32.totalorder %s507, %s521
      %p523 = scmp.eq.s32.totalorder %s74, 0
      %p524 = por %p522, %p523
      %s526 = sadd.s32 %s525, 1
      %p529 = scmp.eq.s32.totalorder %s68, 1
      %p530 = scmp.ne.s32.totalorder %s525, %s527
      %p531 = scmp.eq.s32.totalorder %s68, 0
      %p532 = por %p530, %p531
      %p533 = scmp.ne.s32.totalorder %s525, %s527
      %p534 = scmp.eq.s32.totalorder %s73, 1
      %p535 = por %p533, %p534
      %p536 = scmp.ne.s32.totalorder %s527, %s528
      %p537 = scmp.eq.s32.totalorder %s73, 0
      %p538 = por %p536, %p537
      %p539 = scmp.ne.s32.totalorder %s527, %s528
      %p540 = scmp.eq.s32.totalorder %s74, 1
      %p541 = por %p539, %p540
      %p543 = scmp.ne.s32.totalorder %s528, %s542
      %p544 = scmp.eq.s32.totalorder %s74, 0
      %p545 = por %p543, %p544
      %s547 = sadd.s32 %s546, 1
      %p550 = scmp.eq.s32.totalorder %s68, 1
      %p551 = scmp.ne.s32.totalorder %s546, %s548
      %p552 = scmp.eq.s32.totalorder %s68, 0
      %p553 = por %p551, %p552
      %p554 = scmp.ne.s32.totalorder %s546, %s548
      %p555 = scmp.eq.s32.totalorder %s73, 1
      %p556 = por %p554, %p555
      %p557 = scmp.ne.s32.totalorder %s548, %s549
      %p558 = scmp.eq.s32.totalorder %s73, 0
      %p559 = por %p557, %p558
      %p560 = scmp.ne.s32.totalorder %s548, %s549
      %p561 = scmp.eq.s32.totalorder %s74, 1
      %p562 = por %p560, %p561
      %p564 = scmp.ne.s32.totalorder %s549, %s563
      %p565 = scmp.eq.s32.totalorder %s74, 0
      %p566 = por %p564, %p565
      %s568 = sadd.s32 %s567, 1
      %p571 = scmp.eq.s32.totalorder %s68, 1
      %p572 = scmp.ne.s32.totalorder %s567, %s569
      %p573 = scmp.eq.s32.totalorder %s68, 0
      %p574 = por %p572, %p573
      %p575 = scmp.ne.s32.totalorder %s567, %s569
      %p576 = scmp.eq.s32.totalorder %s73, 1
      %p577 = por %p575, %p576
      %p578 = scmp.ne.s32.totalorder %s569, %s570
      %p579 = scmp.eq.s32.totalorder %s73, 0
      %p580 = por %p578, %p579
      %p581 = scmp.ne.s32.totalorder %s569, %s570
      %p582 = scmp.eq.s32.totalorder %s74, 1
      %p583 = por %p581, %p582
      %p585 = scmp.ne.s32.totalorder %s570, %s584
      %p586 = scmp.eq.s32.totalorder %s74, 0
      %p587 = por %p585, %p586
      %s589 = sadd.s32 %s588, 1
      %p592 = scmp.eq.s32.totalorder %s68, 1
      %p593 = scmp.ne.s32.totalorder %s588, %s590
      %p594 = scmp.eq.s32.totalorder %s68, 0
      %p595 = por %p593, %p594
      %p596 = scmp.ne.s32.totalorder %s588, %s590
      %p597 = scmp.eq.s32.totalorder %s73, 1
      %p598 = por %p596, %p597
      %p599 = scmp.ne.s32.totalorder %s590, %s591
      %p600 = scmp.eq.s32.totalorder %s73, 0
      %p601 = por %p599, %p600
      %p602 = scmp.ne.s32.totalorder %s590, %s591
      %p603 = scmp.eq.s32.totalorder %s74, 1
      %p604 = por %p602, %p603
      %p606 = scmp.ne.s32.totalorder %s591, %s605
      %p607 = scmp.eq.s32.totalorder %s74, 0
      %p608 = por %p606, %p607
      %s610 = sadd.s32 %s609, 1
      %p613 = scmp.eq.s32.totalorder %s68, 1
      %p614 = scmp.ne.s32.totalorder %s609, %s611
      %p615 = scmp.eq.s32.totalorder %s68, 0
      %p616 = por %p614, %p615
      %p617 = scmp.ne.s32.totalorder %s609, %s611
      %p618 = scmp.eq.s32.totalorder %s73, 1
      %p619 = por %p617, %p618
      %p620 = scmp.ne.s32.totalorder %s611, %s612
      %p621 = scmp.eq.s32.totalorder %s73, 0
      %p622 = por %p620, %p621
      %p623 = scmp.ne.s32.totalorder %s611, %s612
      %p624 = scmp.eq.s32.totalorder %s74, 1
      %p625 = por %p623, %p624
      %p627 = scmp.ne.s32.totalorder %s612, %s626
      %p628 = scmp.eq.s32.totalorder %s74, 0
      %p629 = por %p627, %p628
      %s631 = sadd.s32 %s630, 1
      %p634 = scmp.eq.s32.totalorder %s68, 1
      %p635 = scmp.ne.s32.totalorder %s630, %s632
      %p636 = scmp.eq.s32.totalorder %s68, 0
      %p637 = por %p635, %p636
      %p638 = scmp.ne.s32.totalorder %s630, %s632
      %p639 = scmp.eq.s32.totalorder %s73, 1
      %p640 = por %p638, %p639
      %p641 = scmp.ne.s32.totalorder %s632, %s633
      %p642 = scmp.eq.s32.totalorder %s73, 0
      %p643 = por %p641, %p642
      %p644 = scmp.ne.s32.totalorder %s632, %s633
      %p645 = scmp.eq.s32.totalorder %s74, 1
      %p646 = por %p644, %p645
      %p648 = scmp.ne.s32.totalorder %s633, %s647
      %p649 = scmp.eq.s32.totalorder %s74, 0
      %p650 = por %p648, %p649
      %s652 = sadd.s32 %s651, 1
      %p655 = scmp.eq.s32.totalorder %s68, 1
      %p656 = scmp.ne.s32.totalorder %s651, %s653
      %p657 = scmp.eq.s32.totalorder %s68, 0
      %p658 = por %p656, %p657
      %p659 = scmp.ne.s32.totalorder %s651, %s653
      %p660 = scmp.eq.s32.totalorder %s73, 1
      %p661 = por %p659, %p660
      %p662 = scmp.ne.s32.totalorder %s653, %s654
      %p663 = scmp.eq.s32.totalorder %s73, 0
      %p664 = por %p662, %p663
      %p665 = scmp.ne.s32.totalorder %s653, %s654
      %p666 = scmp.eq.s32.totalorder %s74, 1
      %p667 = por %p665, %p666
      %p669 = scmp.ne.s32.totalorder %s654, %s668
      %p670 = scmp.eq.s32.totalorder %s74, 0
      %p671 = por %p669, %p670
      %s673 = sadd.s32 %s672, 1
      %p676 = scmp.eq.s32.totalorder %s68, 1
      %p677 = scmp.ne.s32.totalorder %s672, %s674
      %p678 = scmp.eq.s32.totalorder %s68, 0
      %p679 = por %p677, %p678
      %p680 = scmp.ne.s32.totalorder %s672, %s674
      %p681 = scmp.eq.s32.totalorder %s73, 1
      %p682 = por %p680, %p681
      %p683 = scmp.ne.s32.totalorder %s674, %s675
      %p684 = scmp.eq.s32.totalorder %s73, 0
      %p685 = por %p683, %p684
      %p686 = scmp.ne.s32.totalorder %s674, %s675
      %p687 = scmp.eq.s32.totalorder %s74, 1
      %p688 = por %p686, %p687
      %p690 = scmp.ne.s32.totalorder %s675, %s689
      %p691 = scmp.eq.s32.totalorder %s74, 0
      %p692 = por %p690, %p691
      %s694 = sadd.s32 %s693, 1
      %p697 = scmp.eq.s32.totalorder %s68, 1
      %p698 = scmp.ne.s32.totalorder %s693, %s695
      %p699 = scmp.eq.s32.totalorder %s68, 0
      %p700 = por %p698, %p699
      %p701 = scmp.ne.s32.totalorder %s693, %s695
      %p702 = scmp.eq.s32.totalorder %s73, 1
      %p703 = por %p701, %p702
      %p704 = scmp.ne.s32.totalorder %s695, %s696
      %p705 = scmp.eq.s32.totalorder %s73, 0
      %p706 = por %p704, %p705
      %p707 = scmp.ne.s32.totalorder %s695, %s696
      %p708 = scmp.eq.s32.totalorder %s74, 1
      %p709 = por %p707, %p708
      %p711 = scmp.ne.s32.totalorder %s696, %s710
      %p712 = scmp.eq.s32.totalorder %s74, 0
      %p713 = por %p711, %p712
      %s714 = ssub.s32 %s75, %s87
      %s715 = ssub.s32 %s76, %s83
      %s716 = sor.u32 %s714, %s715
      %p717 = scmp.eq.s32.totalorder %s716, 0
      %s719 = sadd.s32 %s718, 1
      %s720 = scalar_select %p717, %s718, %s719
      %p723 = pneg %p717
      %p724 = scmp.eq.s32.totalorder %s68, 1
      %p725 = por %p723, %p724
      %p726 = scmp.ne.s32.totalorder %s718, %s721
      %p727 = scmp.eq.s32.totalorder %s68, 0
      %p728 = por %p726, %p727
      %p729 = scmp.ne.s32.totalorder %s718, %s721
      %p730 = scmp.eq.s32.totalorder %s73, 1
      %p731 = por %p729, %p730
      %p732 = scmp.ne.s32.totalorder %s721, %s722
      %p733 = scmp.eq.s32.totalorder %s73, 0
      %p734 = por %p732, %p733
      %p735 = scmp.ne.s32.totalorder %s721, %s722
      %p736 = scmp.eq.s32.totalorder %s74, 1
      %p737 = por %p735, %p736
      %p739 = scmp.ne.s32.totalorder %s722, %s738
      %p740 = scmp.eq.s32.totalorder %s74, 0
      %p741 = por %p739, %p740
      %p742 = scmp.le.s32.totalorder 1, %s68
      %p743 = scmp.lt.s32.totalorder %s68, 3
      %p744 = pnand %p742, %p743
      %p745 = pneg %p744
      // Predicated region
      $region9: #{tpu_custom_call.1} parent=5 // pred_check
        _
      $region10: #{tpu_custom_call.1} parent=5 // pred_check_branch
        %747 = sbr.rel (%p744) target = $region12
      $region11: #{tpu_custom_call.1} parent=5 // pred_region
        %s748 = ssub.s32 %s68, 1
        // Predicated region
        $region13: #{tpu_custom_call.1} parent=11 // pred_check
          %p749 = pneg %p181
        $region14: #{tpu_custom_call.1} parent=11 // pred_check_branch
          %751 = sbr.rel (%p749) target = $region16
        $region15: #{tpu_custom_call.1} parent=11 // pred_region
          _
        $region16: #{tpu_custom_call.1} parent=11 // pred_fallthru
          _
        // Predicated region
        $region17: #{tpu_custom_call.1} parent=11 // pred_check
          %p752 = pneg %p202
        $region18: #{tpu_custom_call.1} parent=11 // pred_check_branch
          %754 = sbr.rel (%p752) target = $region20
        $region19: #{tpu_custom_call.1} parent=11 // pred_region
          _
        $region20: #{tpu_custom_call.1} parent=11 // pred_fallthru
          _
        // Predicated region
        $region21: #{tpu_custom_call.1} parent=11 // pred_check
          %p755 = pneg %p223
        $region22: #{tpu_custom_call.1} parent=11 // pred_check_branch
          %757 = sbr.rel (%p755) target = $region24
        $region23: #{tpu_custom_call.1} parent=11 // pred_region
          _
        $region24: #{tpu_custom_call.1} parent=11 // pred_fallthru
          _
        // Predicated region
        $region25: #{tpu_custom_call.1} parent=11 // pred_check
          %p758 = pneg %p244
        $region26: #{tpu_custom_call.1} parent=11 // pred_check_branch
          %760 = sbr.rel (%p758) target = $region28
        $region27: #{tpu_custom_call.1} parent=11 // pred_region
          _
        $region28: #{tpu_custom_call.1} parent=11 // pred_fallthru
          _
        // Predicated region
        $region29: #{tpu_custom_call.1} parent=11 // pred_check
          %p761 = pneg %p265
        $region30: #{tpu_custom_call.1} parent=11 // pred_check_branch
          %763 = sbr.rel (%p761) target = $region32
        $region31: #{tpu_custom_call.1} parent=11 // pred_region
          _
        $region32: #{tpu_custom_call.1} parent=11 // pred_fallthru
          _
        // Predicated region
        $region33: #{tpu_custom_call.1} parent=11 // pred_check
          %p764 = pneg %p286
        $region34: #{tpu_custom_call.1} parent=11 // pred_check_branch
          %766 = sbr.rel (%p764) target = $region36
        $region35: #{tpu_custom_call.1} parent=11 // pred_region
          _
        $region36: #{tpu_custom_call.1} parent=11 // pred_fallthru
          _
        // Predicated region
        $region37: #{tpu_custom_call.1} parent=11 // pred_check
          %p767 = pneg %p307
        $region38: #{tpu_custom_call.1} parent=11 // pred_check_branch
          %769 = sbr.rel (%p767) target = $region40
        $region39: #{tpu_custom_call.1} parent=11 // pred_region
          _
        $region40: #{tpu_custom_call.1} parent=11 // pred_fallthru
          _
        // Predicated region
        $region41: #{tpu_custom_call.1} parent=11 // pred_check
          %p770 = pneg %p328
        $region42: #{tpu_custom_call.1} parent=11 // pred_check_branch
          %772 = sbr.rel (%p770) target = $region44
        $region43: #{tpu_custom_call.1} parent=11 // pred_region
          _
        $region44: #{tpu_custom_call.1} parent=11 // pred_fallthru
          _
        // Predicated region
        $region45: #{tpu_custom_call.1} parent=11 // pred_check
          %p773 = pneg %p349
        $region46: #{tpu_custom_call.1} parent=11 // pred_check_branch
          %775 = sbr.rel (%p773) target = $region48
        $region47: #{tpu_custom_call.1} parent=11 // pred_region
          _
        $region48: #{tpu_custom_call.1} parent=11 // pred_fallthru
          _
        // Predicated region
        $region49: #{tpu_custom_call.1} parent=11 // pred_check
          %p776 = pneg %p370
        $region50: #{tpu_custom_call.1} parent=11 // pred_check_branch
          %778 = sbr.rel (%p776) target = $region52
        $region51: #{tpu_custom_call.1} parent=11 // pred_region
          _
        $region52: #{tpu_custom_call.1} parent=11 // pred_fallthru
          _
        // Predicated region
        $region53: #{tpu_custom_call.1} parent=11 // pred_check
          %p779 = pneg %p391
        $region54: #{tpu_custom_call.1} parent=11 // pred_check_branch
          %781 = sbr.rel (%p779) target = $region56
        $region55: #{tpu_custom_call.1} parent=11 // pred_region
          _
        $region56: #{tpu_custom_call.1} parent=11 // pred_fallthru
          _
        // Predicated region
        $region57: #{tpu_custom_call.1} parent=11 // pred_check
          %p782 = pneg %p412
        $region58: #{tpu_custom_call.1} parent=11 // pred_check_branch
          %784 = sbr.rel (%p782) target = $region60
        $region59: #{tpu_custom_call.1} parent=11 // pred_region
          _
        $region60: #{tpu_custom_call.1} parent=11 // pred_fallthru
          _
        // Predicated region
        $region61: #{tpu_custom_call.1} parent=11 // pred_check
          %p785 = pneg %p433
        $region62: #{tpu_custom_call.1} parent=11 // pred_check_branch
          %787 = sbr.rel (%p785) target = $region64
        $region63: #{tpu_custom_call.1} parent=11 // pred_region
          _
        $region64: #{tpu_custom_call.1} parent=11 // pred_fallthru
          _
        // Predicated region
        $region65: #{tpu_custom_call.1} parent=11 // pred_check
          %p788 = pneg %p454
        $region66: #{tpu_custom_call.1} parent=11 // pred_check_branch
          %790 = sbr.rel (%p788) target = $region68
        $region67: #{tpu_custom_call.1} parent=11 // pred_region
          _
        $region68: #{tpu_custom_call.1} parent=11 // pred_fallthru
          _
        // Predicated region
        $region69: #{tpu_custom_call.1} parent=11 // pred_check
          %p791 = pneg %p475
        $region70: #{tpu_custom_call.1} parent=11 // pred_check_branch
          %793 = sbr.rel (%p791) target = $region72
        $region71: #{tpu_custom_call.1} parent=11 // pred_region
          _
        $region72: #{tpu_custom_call.1} parent=11 // pred_fallthru
          _
        // Predicated region
        $region73: #{tpu_custom_call.1} parent=11 // pred_check
          %p794 = pneg %p496
        $region74: #{tpu_custom_call.1} parent=11 // pred_check_branch
          %796 = sbr.rel (%p794) target = $region76
        $region75: #{tpu_custom_call.1} parent=11 // pred_region
          _
        $region76: #{tpu_custom_call.1} parent=11 // pred_fallthru
          _
        // Predicated region
        $region77: #{tpu_custom_call.1} parent=11 // pred_check
          %p797 = pneg %p517
        $region78: #{tpu_custom_call.1} parent=11 // pred_check_branch
          %799 = sbr.rel (%p797) target = $region80
        $region79: #{tpu_custom_call.1} parent=11 // pred_region
          _
        $region80: #{tpu_custom_call.1} parent=11 // pred_fallthru
          _
        // Predicated region
        $region81: #{tpu_custom_call.1} parent=11 // pred_check
          %p800 = pneg %p538
        $region82: #{tpu_custom_call.1} parent=11 // pred_check_branch
          %802 = sbr.rel (%p800) target = $region84
        $region83: #{tpu_custom_call.1} parent=11 // pred_region
          _
        $region84: #{tpu_custom_call.1} parent=11 // pred_fallthru
          _
        // Predicated region
        $region85: #{tpu_custom_call.1} parent=11 // pred_check
          %p803 = pneg %p559
        $region86: #{tpu_custom_call.1} parent=11 // pred_check_branch
          %805 = sbr.rel (%p803) target = $region88
        $region87: #{tpu_custom_call.1} parent=11 // pred_region
          _
        $region88: #{tpu_custom_call.1} parent=11 // pred_fallthru
          _
        // Predicated region
        $region89: #{tpu_custom_call.1} parent=11 // pred_check
          %p806 = pneg %p580
        $region90: #{tpu_custom_call.1} parent=11 // pred_check_branch
          %808 = sbr.rel (%p806) target = $region92
        $region91: #{tpu_custom_call.1} parent=11 // pred_region
          _
        $region92: #{tpu_custom_call.1} parent=11 // pred_fallthru
          _
        // Predicated region
        $region93: #{tpu_custom_call.1} parent=11 // pred_check
          %p809 = pneg %p601
        $region94: #{tpu_custom_call.1} parent=11 // pred_check_branch
          %811 = sbr.rel (%p809) target = $region96
        $region95: #{tpu_custom_call.1} parent=11 // pred_region
          _
        $region96: #{tpu_custom_call.1} parent=11 // pred_fallthru
          _
        // Predicated region
        $region97: #{tpu_custom_call.1} parent=11 // pred_check
          %p812 = pneg %p622
        $region98: #{tpu_custom_call.1} parent=11 // pred_check_branch
          %814 = sbr.rel (%p812) target = $region100
        $region99: #{tpu_custom_call.1} parent=11 // pred_region
          _
        $region100: #{tpu_custom_call.1} parent=11 // pred_fallthru
          _
        // Predicated region
        $region101: #{tpu_custom_call.1} parent=11 // pred_check
          %p815 = pneg %p643
        $region102: #{tpu_custom_call.1} parent=11 // pred_check_branch
          %817 = sbr.rel (%p815) target = $region104
        $region103: #{tpu_custom_call.1} parent=11 // pred_region
          _
        $region104: #{tpu_custom_call.1} parent=11 // pred_fallthru
          _
        // Predicated region
        $region105: #{tpu_custom_call.1} parent=11 // pred_check
          %p818 = pneg %p664
        $region106: #{tpu_custom_call.1} parent=11 // pred_check_branch
          %820 = sbr.rel (%p818) target = $region108
        $region107: #{tpu_custom_call.1} parent=11 // pred_region
          _
        $region108: #{tpu_custom_call.1} parent=11 // pred_fallthru
          _
        // Predicated region
        $region109: #{tpu_custom_call.1} parent=11 // pred_check
          %p821 = pneg %p685
        $region110: #{tpu_custom_call.1} parent=11 // pred_check_branch
          %823 = sbr.rel (%p821) target = $region112
        $region111: #{tpu_custom_call.1} parent=11 // pred_region
          _
        $region112: #{tpu_custom_call.1} parent=11 // pred_fallthru
          _
        // Predicated region
        $region113: #{tpu_custom_call.1} parent=11 // pred_check
          %p824 = pneg %p706
        $region114: #{tpu_custom_call.1} parent=11 // pred_check_branch
          %826 = sbr.rel (%p824) target = $region116
        $region115: #{tpu_custom_call.1} parent=11 // pred_region
          _
        $region116: #{tpu_custom_call.1} parent=11 // pred_fallthru
          _
      $region12: #{tpu_custom_call.1} parent=5 // pred_fallthru
        _
      %p827 = scmp.lt.s32.totalorder %s68, 2
      // Predicated region
      $region117: #{tpu_custom_call.1} parent=5 // pred_check
        %p828 = pneg %p827
      $region118: #{tpu_custom_call.1} parent=5 // pred_check_branch
        %830 = sbr.rel (%p828) target = $region120
      $region119: #{tpu_custom_call.1} parent=5 // pred_region
        // Predicated region
        $region121: #{tpu_custom_call.1} parent=119 // pred_check
          %p831 = pneg %p102
        $region122: #{tpu_custom_call.1} parent=119 // pred_check_branch
          %833 = sbr.rel (%p831) target = $region124
        $region123: #{tpu_custom_call.1} parent=119 // pred_region
          %p834 = scmp.lt.s32.totalorder %s75, 1
          %s835 = scalar_select %p834, %s75, 1
          %p836 = scmp.lt.s32.totalorder %s76, 0
          %s837 = scalar_select %p836, %s76, 0
          %s838 = sadd.s32 %s837, %s835
          %s839 = smul.addr %s838, 8
          %s840 = scalar_lea.vmem %s1, %s839
        $region124: #{tpu_custom_call.1} parent=119 // pred_fallthru
          _
        // Predicated region
        $region125: #{tpu_custom_call.1} parent=119 // pred_check
          %p841 = pneg %p128
        $region126: #{tpu_custom_call.1} parent=119 // pred_check_branch
          %843 = sbr.rel (%p841) target = $region128
        $region127: #{tpu_custom_call.1} parent=119 // pred_region
          %p844 = scmp.lt.s32.totalorder %s75, 1
          %s845 = scalar_select %p844, %s75, 1
          %s846 = smul.addr %s845, 8
          %s847 = scalar_lea.vmem %s3, %s846
        $region128: #{tpu_custom_call.1} parent=119 // pred_fallthru
          _
        // Predicated region
        $region129: #{tpu_custom_call.1} parent=119 // pred_check
          %p848 = pneg %p154
        $region130: #{tpu_custom_call.1} parent=119 // pred_check_branch
          %850 = sbr.rel (%p848) target = $region132
        $region131: #{tpu_custom_call.1} parent=119 // pred_region
          %p851 = scmp.lt.s32.totalorder %s75, 1
          %s852 = scalar_select %p851, %s75, 1
          %s853 = smul.addr %s852, 2
          %s854 = smul.addr %s853, 8
          %s855 = scalar_lea.vmem %s5, %s854
        $region132: #{tpu_custom_call.1} parent=119 // pred_fallthru
          _
      $region120: #{tpu_custom_call.1} parent=5 // pred_fallthru
        _
      %p856 = scmp.le.s32.totalorder 1, %s68
      %p857 = scmp.lt.s32.totalorder %s68, 3
      %p858 = pnand %p856, %p857
      %p859 = pneg %p858
      // Predicated region
      $region133: #{tpu_custom_call.1} parent=5 // pred_check
        _
      $region134: #{tpu_custom_call.1} parent=5 // pred_check_branch
        %861 = sbr.rel (%p858) target = $region136
      $region135: #{tpu_custom_call.1} parent=5 // pred_region
        %s862 = ssub.s32 %s68, 1
        %p863 = scmp.lt.s32.totalorder %s77, 1
        %s864 = scalar_select %p863, %s77, 1
        %p865 = scmp.lt.s32.totalorder %s78, 0
        %s866 = scalar_select %p865, %s78, 0
        %s867 = sadd.s32 %s866, %s864
        %s868 = smul.addr %s867, 8
        %s869 = scalar_lea.vmem %s1, %s868
        %p870 = pneg %p108
        %p871 = pneg %p105
        %p872 = scmp.lt.s32.totalorder %s77, 1
        %s873 = scalar_select %p872, %s77, 1
        %s874 = smul.addr %s873, 8
        %s875 = scalar_lea.vmem %s3, %s874
        %p876 = pneg %p134
        %p877 = pneg %p131
        %p878 = scmp.lt.s32.totalorder %s77, 1
        %s879 = scalar_select %p878, %s77, 1
        %s880 = smul.addr %s879, 2
        %s881 = smul.addr %s880, 8
        %s882 = scalar_lea.vmem %s5, %s881
        %p883 = pneg %p160
        %p884 = pneg %p157
        %p885 = pneg %p181
        %p886 = pneg %p178
        %p887 = pneg %p202
        %p888 = pneg %p199
        %p889 = pneg %p223
        %p890 = pneg %p220
        %p891 = pneg %p244
        %p892 = pneg %p241
        %p893 = pneg %p265
        %p894 = pneg %p262
        %p895 = pneg %p286
        %p896 = pneg %p283
        %p897 = pneg %p307
        %p898 = pneg %p304
        %p899 = pneg %p328
        %p900 = pneg %p325
        %p901 = pneg %p349
        %p902 = pneg %p346
        %p903 = pneg %p370
        %p904 = pneg %p367
        %p905 = pneg %p391
        %p906 = pneg %p388
        %p907 = pneg %p412
        %p908 = pneg %p409
        %p909 = pneg %p433
        %p910 = pneg %p430
        %p911 = pneg %p454
        %p912 = pneg %p451
        %p913 = pneg %p475
        %p914 = pneg %p472
        %p915 = pneg %p496
        %p916 = pneg %p493
        %p917 = pneg %p517
        %p918 = pneg %p514
        %p919 = pneg %p538
        %p920 = pneg %p535
        %p921 = pneg %p559
        %p922 = pneg %p556
        %p923 = pneg %p580
        %p924 = pneg %p577
        %p925 = pneg %p601
        %p926 = pneg %p598
        %p927 = pneg %p622
        %p928 = pneg %p619
        %p929 = pneg %p643
        %p930 = pneg %p640
        %p931 = pneg %p664
        %p932 = pneg %p661
        %p933 = pneg %p685
        %p934 = pneg %p682
        %p935 = pneg %p706
        %p936 = pneg %p703
        %p937 = pneg %p734
        %p938 = pneg %p731
        %s939 = sand.u32 %s721, 1
        %s940 = scalar_lea.sflag [#allocation3], %s939
        %s941 = sand.u32 %s721, 1
        %s942 = smul.addr %s941, 8
        %s943 = scalar_lea.vmem [#allocation2], %s942
        %p944 = scmp.lt.s32.totalorder %s77, 1
        %s945 = scalar_select %p944, %s77, 1
        %p946 = scmp.lt.s32.totalorder %s78, 0
        %s947 = scalar_select %p946, %s78, 0
        %s948 = sadd.s32 %s947, %s945
        %s949 = smul.addr %s948, 8
        %s950 = scalar_lea.vmem %s1, %s949
        %p951 = scmp.lt.s32.totalorder %s77, 1
        %s952 = scalar_select %p951, %s77, 1
        %s953 = smul.addr %s952, 8
        %s954 = scalar_lea.vmem %s3, %s953
        %p955 = scmp.lt.s32.totalorder %s77, 1
        %s956 = scalar_select %p955, %s77, 1
        %s957 = smul.addr %s956, 2
        %s958 = smul.addr %s957, 8
        %s959 = scalar_lea.vmem %s5, %s958
        %v961 = vld [vmem:[%s950] sm:$0xff]
        loop: start=0, step=1, limit=4
        $region137: #{tpu_custom_call.1} parent=135 // loop_pre_header
          _
        $region138: #{tpu_custom_call.1} parent=135 // loop_header
          %s963 = sphi 0, %s967
          %p964 = scmp.ge.s32.totalorder %s963, 4
          %v968 = vphi 0.0, %v1174
        $region139: #{tpu_custom_call.1} parent=135 // loop_header_branch
          %966 = sbr.rel (%p964) target = $region143
        $region140: #{tpu_custom_call.1} parent=135 // loop_body
          %s969 = smul.u32 %s963, 4
          %s970 = smul.addr %s969, 4
          %s971 = scalar_lea.vmem %s7, %s970
          %v972 = vld [vmem:[%s971] sm:$0xf]
          %v973 = vld [vmem:[%s971 + $0x4] sm:$0xf]
          %v974 = vld [vmem:[%s971 + $0x8] sm:$0xf]
          %v975 = vld [vmem:[%s971 + $0xc] sm:$0xf]
          %v976 = vpack.c.bf16 %v961, %v961
          %s977 = scalar_lea.vmem %s9, %s963
          %v978 = vld [vmem:[%s977] sm:$0x1]
          %v980 = vperm.slane %v978, 0
          %v986 = vunpack.c.l.b16 %v972
          %v987 = vunpack.c.l.b16 %v973
          %v988 = vunpack.c.l.b16 %v974
          %v989 = vunpack.c.l.b16 %v975
          %v990 = vpack.c.b16 %v987, %v986
          %v991 = vpack.c.b16 %v989, %v988
          %vm994 = vcmask 261120
          %v996 = vsel %vm994, %v976, 0
          %998 = vmatpush.bf16.msra.mxu0 0
          %999 = vmatpush.bf16.msra.mxu0 0
          %1000 = vmatpush.bf16.msra.mxu0 0
          %1001 = vmatpush.bf16.msra.mxu0 0
          %1002 = vmatpush.bf16.msra.mxu0 0
          %1003 = vmatpush.bf16.msra.mxu0 0
          %1004 = vmatpush.bf16.msra.mxu0 %v991
          %1005 = vmatpush.bf16.msra.mxu0 %v990
          %1006 = vmatmul.bf16.gmra.mxu0 %v996
          %v1007 = vpop.f32.mrf.mxu0
          %v1008 = vadd.f32 %v980, %v1007
          %v1009 = vpop.f32.mrf.mxu0
          %1010 = vdwg.mxu0
          %v1011 = vmul.f32 %v1008, 0.35355338
          %v1012 = vpack.c.bf16 %v1011, %v1011
          %v1013 = vld [vmem:[%s954] sm:$0xff]
          %s1014 = smul.addr %s969, 4
          %s1015 = scalar_lea.vmem %s11, %s1014
          %v1016 = vld [vmem:[%s1015] sm:$0xf]
          %v1017 = vld [vmem:[%s1015 + $0x4] sm:$0xf]
          %v1018 = vld [vmem:[%s1015 + $0x8] sm:$0xf]
          %v1019 = vld [vmem:[%s1015 + $0xc] sm:$0xf]
          %v1020 = vpack.c.bf16 %v1013, %v1013
          %s1021 = scalar_lea.vmem %s13, %s963
          %v1022 = vld [vmem:[%s1021] sm:$0x1]
          %v1024 = vperm.slane %v1022, 0
          %v1030 = vunpack.c.l.b16 %v1016
          %v1031 = vunpack.c.l.b16 %v1017
          %v1032 = vunpack.c.l.b16 %v1018
          %v1033 = vunpack.c.l.b16 %v1019
          %v1034 = vpack.c.b16 %v1031, %v1030
          %v1035 = vpack.c.b16 %v1033, %v1032
          %v1039 = vsel %vm994, %v1020, 0
          %1041 = vmatpush.bf16.msra.mxu0 0
          %1042 = vmatpush.bf16.msra.mxu0 0
          %1043 = vmatpush.bf16.msra.mxu0 0
          %1044 = vmatpush.bf16.msra.mxu0 0
          %1045 = vmatpush.bf16.msra.mxu0 0
          %1046 = vmatpush.bf16.msra.mxu0 0
          %1047 = vmatpush.bf16.msra.mxu0 %v1035
          %1048 = vmatpush.bf16.msra.mxu0 %v1034
          %1049 = vmatmul.bf16.gmra.mxu0 %v1039
          %v1050 = vpop.f32.mrf.mxu0
          %v1051 = vadd.f32 %v1024, %v1050
          %v1052 = vpop.f32.mrf.mxu0
          %1053 = vdwg.mxu0
          %s1054 = smul.addr %s969, 4
          %s1055 = scalar_lea.vmem %s15, %s1054
          %v1056 = vld [vmem:[%s1055] sm:$0xf]
          %v1057 = vld [vmem:[%s1055 + $0x4] sm:$0xf]
          %v1058 = vld [vmem:[%s1055 + $0x8] sm:$0xf]
          %v1059 = vld [vmem:[%s1055 + $0xc] sm:$0xf]
          %s1060 = scalar_lea.vmem %s17, %s963
          %v1061 = vld [vmem:[%s1060] sm:$0x1]
          %v1063 = vperm.slane %v1061, 0
          %v1069 = vunpack.c.l.b16 %v1056
          %v1070 = vunpack.c.l.b16 %v1057
          %v1071 = vunpack.c.l.b16 %v1058
          %v1072 = vunpack.c.l.b16 %v1059
          %v1073 = vpack.c.b16 %v1070, %v1069
          %v1074 = vpack.c.b16 %v1072, %v1071
          %1077 = vmatpush.bf16.msra.mxu0 0
          %1078 = vmatpush.bf16.msra.mxu0 0
          %1079 = vmatpush.bf16.msra.mxu0 0
          %1080 = vmatpush.bf16.msra.mxu0 0
          %1081 = vmatpush.bf16.msra.mxu0 0
          %1082 = vmatpush.bf16.msra.mxu0 0
          %1083 = vmatpush.bf16.msra.mxu0 %v1074
          %1084 = vmatpush.bf16.msra.mxu0 %v1073
          %1085 = vmatmul.bf16.gmra.mxu0 %v1039
          %v1086 = vpop.f32.mrf.mxu0
          %v1087 = vadd.f32 %v1063, %v1086
          %v1088 = vpop.f32.mrf.mxu0
          %1089 = vdwg.mxu0
          %v1090 = vpack.c.bf16 %v1051, %v1051
          %vm1091 = vcmask 64512
          %v1093 = vsel %vm1091, %v1012, 0
          %v1096 = vsel %vm1091, %v1090, 0
          %1098 = vmatpush.bf16.xpose.msra.mxu0 0
          %1099 = vmatpush.bf16.xpose.msra.mxu0 0
          %1100 = vmatpush.bf16.xpose.msra.mxu0 0
          %1101 = vmatpush.bf16.xpose.msra.mxu0 0
          %1102 = vmatpush.bf16.xpose.msra.mxu0 0
          %1103 = vmatpush.bf16.xpose.msra.mxu0 0
          %1104 = vmatpush.bf16.xpose.msra.mxu0 0
          %1105 = vmatpush.bf16.xpose.msra.mxu0 %v1096
          %1106 = vmatmul.bf16.gmra.mxu0 %v1093
          %v1107 = vpop.f32.mrf.mxu0
          %v1108 = vadd.f32 0.0, %v1107
          %v1109 = vpop.f32.mrf.mxu0
          %1110 = vdwg.mxu0
          %v1111 = vsel %vm1091, %v1108, -inf
          %1112 = vmax.xlane.f32.xlu0 %v1111
          %v1113 = vpop.xlane.xlu0 %1112
          %v1114 = vmax.f32 %v1113, -1e+30
          %v1115 = vsub.f32 -1e+30, %v1114
          %v1116 = vmul.f32 %v1115, 1.442695
          %v1117 = vpow.pop %v1116
          %v1118 = vsub.f32 %v1108, %v1114
          %v1119 = vmul.f32 %v1118, 1.442695
          %v1120 = vpow.pop %v1119
          %v1121 = vmul.f32 %v1117, 0.0
          %v1122 = vsel %vm1091, %v1120, 0.0
          %1123 = vadd.xlane.f32.xlu0 %v1122
          %v1124 = vpop.xlane.xlu0 %1123
          %v1125 = vadd.f32 %v1121, %v1124
          %v1126 = vpack.c.bf16 %v1120, %v1120
          %v1127 = vpack.c.bf16 %v1087, %v1087
          %v1129 = vsel %vm1091, %v1126, 0
          %vm1131 = vcmask 1043456
          %v1133 = vsel %vm1131, %v1127, 0
          %1135 = vmatpush.bf16.msra.mxu0 0
          %1136 = vmatpush.bf16.msra.mxu0 0
          %1137 = vmatpush.bf16.msra.mxu0 0
          %1138 = vmatpush.bf16.msra.mxu0 0
          %1139 = vmatpush.bf16.msra.mxu0 0
          %1140 = vmatpush.bf16.msra.mxu0 0
          %1141 = vmatpush.bf16.msra.mxu0 0
          %1142 = vmatpush.bf16.msra.mxu0 %v1133
          %1143 = vmatmul.bf16.gmra.mxu0 %v1129
          %v1144 = vpop.f32.mrf.mxu0
          %v1145 = vadd.f32 0.0, %v1144
          %v1146 = vpop.f32.mrf.mxu0
          %1147 = vdwg.mxu0
          %v1148 = vadd.f32 %v1121, %v1145
          %v1149 = vrcp.pop %v1125
          %v1150 = vmul.f32 %v1148, %v1149
          %s1151 = smul.addr %s963, 4
          %s1152 = scalar_lea.vmem %s19, %s1151
          %v1153 = vld [vmem:[%s1152] sm:$0xf]
          %v1154 = vpack.c.bf16 %v1150, %v1150
          %v1156 = vsel %vm1091, %v1154, 0
          %v1159 = vsel %vm1131, %v1153, 0
          %1161 = vmatpush.bf16.msra.mxu0 0
          %1162 = vmatpush.bf16.msra.mxu0 0
          %1163 = vmatpush.bf16.msra.mxu0 0
          %1164 = vmatpush.bf16.msra.mxu0 0
          %1165 = vmatpush.bf16.msra.mxu0 0
          %1166 = vmatpush.bf16.msra.mxu0 0
          %1167 = vmatpush.bf16.msra.mxu0 0
          %1168 = vmatpush.bf16.msra.mxu0 %v1159
          %1169 = vmatmul.bf16.gmra.mxu0 %v1156
          %v1170 = vpop.f32.mrf.mxu0
          %v1171 = vadd.f32 0.0, %v1170
          %v1172 = vpop.f32.mrf.mxu0
          %1173 = vdwg.mxu0
          %v1174 = vadd.f32 %v968, %v1171
        $region141: #{tpu_custom_call.1} parent=135 // loop_footer
          %s967 = sadd.s32 1, %s963
        $region142: #{tpu_custom_call.1} parent=135 // loop_footer_branch
          %962 = sbr.rel target = $region138
        $region143: #{tpu_custom_call.1} parent=135 // loop_exit
          _
        %v1175 = vld [vmem:[%s21] sm:$0x1]
        %v1177 = vperm.slane %v1175, 0
        %v1179 = vadd.f32 %v968, %v1177
        %v1180 = vadd.f32 %v961, %v1179
        %v1181 = vld [vmem:[%s39] sm:$0x1]
        %v1182 = vld [vmem:[%s41] sm:$0x1]
        %vm1183 = vcmask 261120
        %v1184 = vsel %vm1183, %v1180, 0.0
        %1185 = vadd.xlane.f32.xlu0 %v1184
        %v1186 = vpop.xlane.xlu0 %1185
        %v1187 = vrcp.pop 32.0
        %v1188 = vmul.f32 32.0, %v1187
        %v1189 = vsub.f32 1.0, %v1188
        %v1190 = vmul.f32 %v1187, %v1189
        %v1191 = vadd.f32 %v1187, %v1190
        %vm1192 = vweird.f32 %v1187
        %v1193 = vsel %vm1192, %v1187, %v1191
        %v1194 = vmul.f32 %v1186, %v1193
        %v1195 = vsub.f32 %v1180, %v1194
        %v1196 = vmul.f32 %v1195, %v1195
        %v1197 = vsel %vm1183, %v1196, 0.0
        %1198 = vadd.xlane.f32.xlu0 %v1197
        %v1199 = vpop.xlane.xlu0 %1198
        %v1200 = vmul.f32 %v1199, %v1193
        %v1201 = vadd.f32 %v1200, 1e-05
        %v1202 = vrsqrt.pop %v1201
        %v1203 = vmul.f32 %v1202, %v1201
        %v1204 = vmul.f32 %v1203, %v1202
        %v1205 = vmul.f32 0.5, %v1204
        %v1206 = vsub.f32 1.5, %v1205
        %v1207 = vmul.f32 %v1202, %v1206
        %vm1208 = vweird.f32 %v1201
        %vm1209 = vweird.f32 %v1202
        %vm1210 = vmor %vm1208, %vm1209
        %v1211 = vsel %vm1210, %v1202, %v1207
        %v1212 = vmul.f32 %v1195, %v1211
        %v1214 = vperm.slane %v1181, 0
        %v1216 = vmul.f32 %v1212, %v1214
        %v1218 = vperm.slane %v1182, 0
        %v1220 = vadd.f32 %v1216, %v1218
        loop: start=0, step=1, limit=4
        $region144: #{tpu_custom_call.1} parent=135 // loop_pre_header
          _
        $region145: #{tpu_custom_call.1} parent=135 // loop_header
          %s1222 = sphi 0, %s1226
          %p1223 = scmp.ge.s32.totalorder %s1222, 4
          %v1227 = vphi 0.0, %v1433
        $region146: #{tpu_custom_call.1} parent=135 // loop_header_branch
          %1225 = sbr.rel (%p1223) target = $region150
        $region147: #{tpu_custom_call.1} parent=135 // loop_body
          %s1228 = smul.u32 %s1222, 4
          %s1229 = smul.addr %s1228, 4
          %s1230 = scalar_lea.vmem %s23, %s1229
          %v1231 = vld [vmem:[%s1230] sm:$0xf]
          %v1232 = vld [vmem:[%s1230 + $0x4] sm:$0xf]
          %v1233 = vld [vmem:[%s1230 + $0x8] sm:$0xf]
          %v1234 = vld [vmem:[%s1230 + $0xc] sm:$0xf]
          %v1235 = vpack.c.bf16 %v1220, %v1220
          %s1236 = scalar_lea.vmem %s25, %s1222
          %v1237 = vld [vmem:[%s1236] sm:$0x1]
          %v1239 = vperm.slane %v1237, 0
          %v1245 = vunpack.c.l.b16 %v1231
          %v1246 = vunpack.c.l.b16 %v1232
          %v1247 = vunpack.c.l.b16 %v1233
          %v1248 = vunpack.c.l.b16 %v1234
          %v1249 = vpack.c.b16 %v1246, %v1245
          %v1250 = vpack.c.b16 %v1248, %v1247
          %v1254 = vsel %vm1183, %v1235, 0
          %1256 = vmatpush.bf16.msra.mxu0 0
          %1257 = vmatpush.bf16.msra.mxu0 0
          %1258 = vmatpush.bf16.msra.mxu0 0
          %1259 = vmatpush.bf16.msra.mxu0 0
          %1260 = vmatpush.bf16.msra.mxu0 0
          %1261 = vmatpush.bf16.msra.mxu0 0
          %1262 = vmatpush.bf16.msra.mxu0 %v1250
          %1263 = vmatpush.bf16.msra.mxu0 %v1249
          %1264 = vmatmul.bf16.gmra.mxu0 %v1254
          %v1265 = vpop.f32.mrf.mxu0
          %v1266 = vadd.f32 %v1239, %v1265
          %v1267 = vpop.f32.mrf.mxu0
          %1268 = vdwg.mxu0
          %v1269 = vmul.f32 %v1266, 0.35355338
          %v1270 = vpack.c.bf16 %v1269, %v1269
          %v1271 = vld [vmem:[%s959] sm:$0xff]
          %v1272 = vld [vmem:[%s959 + $0x8] sm:$0xff]
          %s1273 = smul.addr %s1228, 4
          %s1274 = scalar_lea.vmem %s27, %s1273
          %v1275 = vld [vmem:[%s1274] sm:$0xf]
          %v1276 = vld [vmem:[%s1274 + $0x4] sm:$0xf]
          %v1277 = vld [vmem:[%s1274 + $0x8] sm:$0xf]
          %v1278 = vld [vmem:[%s1274 + $0xc] sm:$0xf]
          %v1279 = vpack.c.bf16 %v1272, %v1271
          %s1280 = scalar_lea.vmem %s29, %s1222
          %v1281 = vld [vmem:[%s1280] sm:$0x1]
          %v1283 = vperm.slane %v1281, 0
          %v1289 = vunpack.c.l.b16 %v1275
          %v1290 = vunpack.c.l.b16 %v1276
          %v1291 = vunpack.c.l.b16 %v1277
          %v1292 = vunpack.c.l.b16 %v1278
          %v1293 = vpack.c.b16 %v1290, %v1289
          %v1294 = vpack.c.b16 %v1292, %v1291
          %v1298 = vsel %vm1183, %v1279, 0
          %1300 = vmatpush.bf16.msra.mxu0 0
          %1301 = vmatpush.bf16.msra.mxu0 0
          %1302 = vmatpush.bf16.msra.mxu0 0
          %1303 = vmatpush.bf16.msra.mxu0 0
          %1304 = vmatpush.bf16.msra.mxu0 0
          %1305 = vmatpush.bf16.msra.mxu0 0
          %1306 = vmatpush.bf16.msra.mxu0 %v1294
          %1307 = vmatpush.bf16.msra.mxu0 %v1293
          %1308 = vmatmul.bf16.gmra.mxu0 %v1298
          %v1309 = vpop.f32.mrf.mxu0
          %v1310 = vadd.f32 %v1283, %v1309
          %v1311 = vpop.f32.mrf.mxu0
          %v1312 = vadd.f32 %v1283, %v1311
          %1313 = vdwg.mxu0
          %s1314 = smul.addr %s1228, 4
          %s1315 = scalar_lea.vmem %s31, %s1314
          %v1316 = vld [vmem:[%s1315] sm:$0xf]
          %v1317 = vld [vmem:[%s1315 + $0x4] sm:$0xf]
          %v1318 = vld [vmem:[%s1315 + $0x8] sm:$0xf]
          %v1319 = vld [vmem:[%s1315 + $0xc] sm:$0xf]
          %s1320 = scalar_lea.vmem %s33, %s1222
          %v1321 = vld [vmem:[%s1320] sm:$0x1]
          %v1323 = vperm.slane %v1321, 0
          %v1329 = vunpack.c.l.b16 %v1316
          %v1330 = vunpack.c.l.b16 %v1317
          %v1331 = vunpack.c.l.b16 %v1318
          %v1332 = vunpack.c.l.b16 %v1319
          %v1333 = vpack.c.b16 %v1330, %v1329
          %v1334 = vpack.c.b16 %v1332, %v1331
          %1337 = vmatpush.bf16.msra.mxu0 0
          %1338 = vmatpush.bf16.msra.mxu0 0
          %1339 = vmatpush.bf16.msra.mxu0 0
          %1340 = vmatpush.bf16.msra.mxu0 0
          %1341 = vmatpush.bf16.msra.mxu0 0
          %1342 = vmatpush.bf16.msra.mxu0 0
          %1343 = vmatpush.bf16.msra.mxu0 %v1334
          %1344 = vmatpush.bf16.msra.mxu0 %v1333
          %1345 = vmatmul.bf16.gmra.mxu0 %v1298
          %v1346 = vpop.f32.mrf.mxu0
          %v1347 = vadd.f32 %v1323, %v1346
          %v1348 = vpop.f32.mrf.mxu0
          %v1349 = vadd.f32 %v1323, %v1348
          %1350 = vdwg.mxu0
          %v1351 = vpack.c.bf16 %v1312, %v1310
          %vm1352 = vcmask 64512
          %v1354 = vsel %vm1352, %v1270, 0
          %v1357 = vsel %vm1352, %v1351, 0
          %1359 = vmatpush.bf16.xpose.msra.mxu0 0
          %1360 = vmatpush.bf16.xpose.msra.mxu0 0
          %1361 = vmatpush.bf16.xpose.msra.mxu0 0
          %1362 = vmatpush.bf16.xpose.msra.mxu0 0
          %1363 = vmatpush.bf16.xpose.msra.mxu0 0
          %1364 = vmatpush.bf16.xpose.msra.mxu0 0
          %1365 = vmatpush.bf16.xpose.msra.mxu0 0
          %1366 = vmatpush.bf16.xpose.msra.mxu0 %v1357
          %1367 = vmatmul.bf16.gmra.mxu0 %v1354
          %v1368 = vpop.f32.mrf.mxu0
          %v1369 = vadd.f32 0.0, %v1368
          %v1370 = vpop.f32.mrf.mxu0
          %1371 = vdwg.mxu0
          %vm1372 = vcmask 130048
          %v1373 = vsel %vm1372, %v1369, -inf
          %1374 = vmax.xlane.f32.xlu0 %v1373
          %v1375 = vpop.xlane.xlu0 %1374
          %v1376 = vmax.f32 %v1375, -1e+30
          %v1377 = vsub.f32 -1e+30, %v1376
          %v1378 = vmul.f32 %v1377, 1.442695
          %v1379 = vpow.pop %v1378
          %v1380 = vsub.f32 %v1369, %v1376
          %v1381 = vmul.f32 %v1380, 1.442695
          %v1382 = vpow.pop %v1381
          %v1383 = vmul.f32 %v1379, 0.0
          %v1384 = vsel %vm1372, %v1382, 0.0
          %1385 = vadd.xlane.f32.xlu0 %v1384
          %v1386 = vpop.xlane.xlu0 %1385
          %v1387 = vadd.f32 %v1383, %v1386
          %v1388 = vpack.c.bf16 %v1382, %v1382
          %v1389 = vpack.c.bf16 %v1349, %v1347
          %v1391 = vsel %vm1372, %v1388, 0
          %1393 = vmatpush.bf16.msra.mxu0 0
          %1394 = vmatpush.bf16.msra.mxu0 0
          %1395 = vmatpush.bf16.msra.mxu0 0
          %1396 = vmatpush.bf16.msra.mxu0 0
          %1397 = vmatpush.bf16.msra.mxu0 0
          %1398 = vmatpush.bf16.msra.mxu0 0
          %1399 = vmatpush.bf16.msra.mxu0 0
          %1400 = vmatpush.bf16.msra.mxu0 %v1389
          %1401 = vmatmul.bf16.gmra.mxu0 %v1391
          %v1402 = vpop.f32.mrf.mxu0
          %v1403 = vadd.f32 0.0, %v1402
          %v1404 = vpop.f32.mrf.mxu0
          %1405 = vdwg.mxu0
          %v1406 = vadd.f32 %v1383, %v1403
          %v1407 = vrcp.pop %v1387
          %v1408 = vmul.f32 %v1406, %v1407
          %s1409 = smul.addr %s1222, 4
          %s1410 = scalar_lea.vmem %s35, %s1409
          %v1411 = vld [vmem:[%s1410] sm:$0xf]
          %v1412 = vpack.c.bf16 %v1408, %v1408
          %v1414 = vsel %vm1352, %v1412, 0
          %vm1416 = vcmask 1043456
          %v1418 = vsel %vm1416, %v1411, 0
          %1420 = vmatpush.bf16.msra.mxu0 0
          %1421 = vmatpush.bf16.msra.mxu0 0
          %1422 = vmatpush.bf16.msra.mxu0 0
          %1423 = vmatpush.bf16.msra.mxu0 0
          %1424 = vmatpush.bf16.msra.mxu0 0
          %1425 = vmatpush.bf16.msra.mxu0 0
          %1426 = vmatpush.bf16.msra.mxu0 0
          %1427 = vmatpush.bf16.msra.mxu0 %v1418
          %1428 = vmatmul.bf16.gmra.mxu0 %v1414
          %v1429 = vpop.f32.mrf.mxu0
          %v1430 = vadd.f32 0.0, %v1429
          %v1431 = vpop.f32.mrf.mxu0
          %1432 = vdwg.mxu0
          %v1433 = vadd.f32 %v1227, %v1430
        $region148: #{tpu_custom_call.1} parent=135 // loop_footer
          %s1226 = sadd.s32 1, %s1222
        $region149: #{tpu_custom_call.1} parent=135 // loop_footer_branch
          %1221 = sbr.rel target = $region145
        $region150: #{tpu_custom_call.1} parent=135 // loop_exit
          _
        %v1434 = vld [vmem:[%s37] sm:$0x1]
        %v1436 = vperm.slane %v1434, 0
        %v1438 = vadd.f32 %v1227, %v1436
        %v1439 = vadd.f32 %v1220, %v1438
        %v1440 = vld [vmem:[%s43] sm:$0x1]
        %v1441 = vld [vmem:[%s45] sm:$0x1]
        %v1442 = vsel %vm1183, %v1439, 0.0
        %1443 = vadd.xlane.f32.xlu0 %v1442
        %v1444 = vpop.xlane.xlu0 %1443
        %v1445 = vmul.f32 %v1444, %v1193
        %v1446 = vsub.f32 %v1439, %v1445
        %v1447 = vmul.f32 %v1446, %v1446
        %v1448 = vsel %vm1183, %v1447, 0.0
        %1449 = vadd.xlane.f32.xlu0 %v1448
        %v1450 = vpop.xlane.xlu0 %1449
        %v1451 = vmul.f32 %v1450, %v1193
        %v1452 = vadd.f32 %v1451, 1e-05
        %v1453 = vrsqrt.pop %v1452
        %v1454 = vmul.f32 %v1453, %v1452
        %v1455 = vmul.f32 %v1454, %v1453
        %v1456 = vmul.f32 0.5, %v1455
        %v1457 = vsub.f32 1.5, %v1456
        %v1458 = vmul.f32 %v1453, %v1457
        %vm1459 = vweird.f32 %v1452
        %vm1460 = vweird.f32 %v1453
        %vm1461 = vmor %vm1459, %vm1460
        %v1462 = vsel %vm1461, %v1453, %v1458
        %v1463 = vmul.f32 %v1446, %v1462
        %v1465 = vperm.slane %v1440, 0
        %v1467 = vmul.f32 %v1463, %v1465
        %v1469 = vperm.slane %v1441, 0
        %v1471 = vadd.f32 %v1467, %v1469
        %v1472 = vld [vmem:[%s51] sm:$0xf]
        %v1473 = vld [vmem:[%s51 + $0x4] sm:$0xf]
        %v1474 = vld [vmem:[%s51 + $0x8] sm:$0xf]
        %v1475 = vld [vmem:[%s51 + $0xc] sm:$0xf]
        %v1476 = vpack.c.bf16 %v1471, %v1471
        %v1477 = vld [vmem:[%s53] sm:$0x1]
        %v1479 = vperm.slane %v1477, 0
        %v1485 = vunpack.c.l.b16 %v1472
        %v1486 = vunpack.c.l.b16 %v1473
        %v1487 = vunpack.c.l.b16 %v1474
        %v1488 = vunpack.c.l.b16 %v1475
        %v1489 = vpack.c.b16 %v1486, %v1485
        %v1490 = vpack.c.b16 %v1488, %v1487
        %v1494 = vsel %vm1183, %v1476, 0
        %1496 = vmatpush.bf16.msra.mxu0 0
        %1497 = vmatpush.bf16.msra.mxu0 0
        %1498 = vmatpush.bf16.msra.mxu0 0
        %1499 = vmatpush.bf16.msra.mxu0 0
        %1500 = vmatpush.bf16.msra.mxu0 0
        %1501 = vmatpush.bf16.msra.mxu0 0
        %1502 = vmatpush.bf16.msra.mxu0 %v1490
        %1503 = vmatpush.bf16.msra.mxu0 %v1489
        %1504 = vmatmul.bf16.gmra.mxu0 %v1494
        %v1505 = vpop.f32.mrf.mxu0
        %v1506 = vadd.f32 %v1479, %v1505
        %v1507 = vpop.f32.mrf.mxu0
        %1508 = vdwg.mxu0
        %v1509 = vmul.f32 %v1506, 0.5
        %v1510 = vmul.f32 %v1506, 0.70710677
        %v1511 = vmul.f32 %v1510, %v1510
        %v1512 = vmin.f32 16.0, %v1511
        %v1513 = vmul.f32 %v1512, 2.1237322e-06
        %v1514 = vadd.f32 %v1513, 0.00028619796
        %v1515 = vmul.f32 %v1512, %v1514
        %v1516 = vadd.f32 %v1515, 0.0036580483
        %v1517 = vmul.f32 %v1512, %v1516
        %v1518 = vadd.f32 %v1517, 0.05243302
        %v1519 = vmul.f32 %v1512, %v1518
        %v1520 = vadd.f32 %v1519, 0.18741608
        %v1521 = vmul.f32 %v1512, %v1520
        %v1522 = vadd.f32 %v1521, 1.1283791
        %v1523 = vmul.f32 %v1510, %v1522
        %v1524 = vmul.f32 %v1512, 3.8918573e-05
        %v1525 = vadd.f32 %v1524, 0.001143296
        %v1526 = vmul.f32 %v1512, %v1525
        %v1527 = vadd.f32 %v1526, 0.014752088
        %v1528 = vmul.f32 %v1512, %v1527
        %v1529 = vadd.f32 %v1528, 0.112945676
        %v1530 = vmul.f32 %v1512, %v1529
        %v1531 = vadd.f32 %v1530, 0.4994258
        %v1532 = vmul.f32 %v1512, %v1531
        %v1533 = vadd.f32 %v1532, 1.0
        %v1534 = vrcp.pop %v1533
        %v1535 = vmul.f32 %v1533, %v1534
        %v1536 = vsub.f32 1.0, %v1535
        %v1537 = vmul.f32 %v1534, %v1536
        %v1538 = vadd.f32 %v1534, %v1537
        %vm1539 = vweird.f32 %v1533
        %vm1540 = vweird.f32 %v1534
        %vm1541 = vmor %vm1539, %vm1540
        %v1542 = vsel %vm1541, %v1534, %v1538
        %v1543 = vand.u32 2147483647, %v1533
        %vm1544 = vcmp.eq.f32.partialorder %v1543, 8.507059e+37
        %v1545 = vand.u32 %v1533, 2147483648
        %v1546 = vor.u32 1.1754944e-38, %v1545
        %v1547 = vsel %vm1544, %v1546, %v1542
        %v1548 = vmul.f32 %v1523, %v1547
        %v1549 = vmin.f32 %v1548, 1.0
        %v1550 = vmax.f32 %v1549, -1.0
        %v1551 = vadd.f32 %v1550, 1.0
        %v1552 = vmul.f32 %v1509, %v1551
        %v1553 = vld [vmem:[%s55] sm:$0xf]
        %v1554 = vld [vmem:[%s55 + $0x4] sm:$0xf]
        %v1555 = vld [vmem:[%s55 + $0x8] sm:$0xf]
        %v1556 = vld [vmem:[%s55 + $0xc] sm:$0xf]
        %v1557 = vld [vmem:[%s55 + $0x10] sm:$0xf]
        %v1558 = vld [vmem:[%s55 + $0x14] sm:$0xf]
        %v1559 = vld [vmem:[%s55 + $0x18] sm:$0xf]
        %v1560 = vld [vmem:[%s55 + $0x1c] sm:$0xf]
        %v1561 = vld [vmem:[%s55 + $0x20] sm:$0xf]
        %v1562 = vld [vmem:[%s55 + $0x24] sm:$0xf]
        %v1563 = vld [vmem:[%s55 + $0x28] sm:$0xf]
        %v1564 = vld [vmem:[%s55 + $0x2c] sm:$0xf]
        %v1565 = vld [vmem:[%s55 + $0x30] sm:$0xf]
        %v1566 = vld [vmem:[%s55 + $0x34] sm:$0xf]
        %v1567 = vld [vmem:[%s55 + $0x38] sm:$0xf]
        %v1568 = vld [vmem:[%s55 + $0x3c] sm:$0xf]
        %v1569 = vpack.c.bf16 %v1552, %v1552
        %v1570 = vld [vmem:[%s57] sm:$0x1]
        %v1572 = vperm.slane %v1570, 0
        %v1590 = vunpack.c.l.b16 %v1553
        %v1591 = vunpack.c.l.b16 %v1554
        %v1592 = vunpack.c.l.b16 %v1555
        %v1593 = vunpack.c.l.b16 %v1556
        %v1594 = vunpack.c.l.b16 %v1557
        %v1595 = vunpack.c.l.b16 %v1558
        %v1596 = vunpack.c.l.b16 %v1559
        %v1597 = vunpack.c.l.b16 %v1560
        %v1598 = vunpack.c.l.b16 %v1561
        %v1599 = vunpack.c.l.b16 %v1562
        %v1600 = vunpack.c.l.b16 %v1563
        %v1601 = vunpack.c.l.b16 %v1564
        %v1602 = vunpack.c.l.b16 %v1565
        %v1603 = vunpack.c.l.b16 %v1566
        %v1604 = vunpack.c.l.b16 %v1567
        %v1605 = vunpack.c.l.b16 %v1568
        %v1606 = vpack.c.b16 %v1591, %v1590
        %v1607 = vpack.c.b16 %v1593, %v1592
        %v1608 = vpack.c.b16 %v1595, %v1594
        %v1609 = vpack.c.b16 %v1597, %v1596
        %v1610 = vpack.c.b16 %v1599, %v1598
        %v1611 = vpack.c.b16 %v1601, %v1600
        %v1612 = vpack.c.b16 %v1603, %v1602
        %v1613 = vpack.c.b16 %v1605, %v1604
        %1622 = vmatpush.bf16.msra.mxu0 %v1613
        %1623 = vmatpush.bf16.msra.mxu0 %v1612
        %1624 = vmatpush.bf16.msra.mxu0 %v1611
        %1625 = vmatpush.bf16.msra.mxu0 %v1610
        %1626 = vmatpush.bf16.msra.mxu0 %v1609
        %1627 = vmatpush.bf16.msra.mxu0 %v1608
        %1628 = vmatpush.bf16.msra.mxu0 %v1607
        %1629 = vmatpush.bf16.msra.mxu0 %v1606
        %1630 = vmatmul.bf16.gmra.mxu0 %v1569
        %v1631 = vpop.f32.mrf.mxu0
        %v1632 = vadd.f32 %v1572, %v1631
        %v1633 = vpop.f32.mrf.mxu0
        %1634 = vdwg.mxu0
        %v1635 = vadd.f32 %v1471, %v1632
        %v1636 = vld [vmem:[%s47] sm:$0x1]
        %v1637 = vld [vmem:[%s49] sm:$0x1]
        %v1638 = vsel %vm1183, %v1635, 0.0
        %1639 = vadd.xlane.f32.xlu0 %v1638
        %v1640 = vpop.xlane.xlu0 %1639
        %v1641 = vmul.f32 %v1640, %v1193
        %v1642 = vsub.f32 %v1635, %v1641
        %v1643 = vmul.f32 %v1642, %v1642
        %v1644 = vsel %vm1183, %v1643, 0.0
        %1645 = vadd.xlane.f32.xlu0 %v1644
        %v1646 = vpop.xlane.xlu0 %1645
        %v1647 = vmul.f32 %v1646, %v1193
        %v1648 = vadd.f32 %v1647, 1e-05
        %v1649 = vrsqrt.pop %v1648
        %v1650 = vmul.f32 %v1649, %v1648
        %v1651 = vmul.f32 %v1650, %v1649
        %v1652 = vmul.f32 0.5, %v1651
        %v1653 = vsub.f32 1.5, %v1652
        %v1654 = vmul.f32 %v1649, %v1653
        %vm1655 = vweird.f32 %v1648
        %vm1656 = vweird.f32 %v1649
        %vm1657 = vmor %vm1655, %vm1656
        %v1658 = vsel %vm1657, %v1649, %v1654
        %v1659 = vmul.f32 %v1642, %v1658
        %v1661 = vperm.slane %v1636, 0
        %v1663 = vmul.f32 %v1659, %v1661
        %v1665 = vperm.slane %v1637, 0
        %v1667 = vadd.f32 %v1663, %v1665
        %1668 = vst.msk [vmem:[%s943] sm:$0xff] %vm1183, %v1667
        %s1669 = sand.u32 %s721, 1
        %s1670 = scalar_lea.sflag [#allocation3], %s1669
        %s1671 = sand.u32 %s721, 1
        %s1672 = smul.addr %s1671, 8
        %s1673 = scalar_lea.vmem [#allocation2], %s1672
        // Predicated region
        $region151: #{tpu_custom_call.1} parent=135 // pred_check
          %p1674 = pneg %p731
        $region152: #{tpu_custom_call.1} parent=135 // pred_check_branch
          %1676 = sbr.rel (%p1674) target = $region154
        $region153: #{tpu_custom_call.1} parent=135 // pred_region
          %1678 = vsyncadd %s1670, 0
          %s1679 = sadd.s32 %s78, %s77
          %s1680 = smul.addr %s1679, 8
          %s1681 = scalar_lea.hbm %s59, %s1680
          %s1683 = sshll.u32 %s1673, 4
          %s1684 = int_to_ptr.vmem [resolvable:$true] %s1683
          %s1685 = sshll.u32 %s1681, 4
          %s1686 = int_to_ptr.hbm [resolvable:$true] %s1685
          %1688 = dma.vmem_to_hbm [thread:$0]  %s1684, 128, %s1686, %s1670
        $region154: #{tpu_custom_call.1} parent=135 // pred_fallthru
          _
      $region136: #{tpu_custom_call.1} parent=5 // pred_fallthru
        _
      %p1689 = scmp.le.s32.totalorder 2, %s68
      // Predicated region
      $region155: #{tpu_custom_call.1} parent=5 // pred_check
        %p1690 = pneg %p1689
      $region156: #{tpu_custom_call.1} parent=5 // pred_check_branch
        %1692 = sbr.rel (%p1690) target = $region158
      $region157: #{tpu_custom_call.1} parent=5 // pred_region
        %s1693 = ssub.s32 %s68, 2
        // Predicated region
        $region159: #{tpu_custom_call.1} parent=157 // pred_check
          %p1694 = pneg %p737
        $region160: #{tpu_custom_call.1} parent=157 // pred_check_branch
          %1696 = sbr.rel (%p1694) target = $region162
        $region161: #{tpu_custom_call.1} parent=157 // pred_region
          %s1697 = sand.u32 %s722, 1
          %s1698 = scalar_lea.sflag [#allocation3], %s1697
          %s1699 = sand.u32 %s722, 1
          %s1700 = smul.addr %s1699, 8
          %s1701 = scalar_lea.vmem [#allocation2], %s1700
          %1703 = dma.done %s1698, 128
        $region162: #{tpu_custom_call.1} parent=157 // pred_fallthru
          _
      $region158: #{tpu_custom_call.1} parent=5 // pred_fallthru
        _
    $region6: #{tpu_custom_call.1} parent=1 // loop_footer
      %s72 = sadd.s32 1, %s68
    $region7: #{tpu_custom_call.1} parent=1 // loop_footer_branch
      %67 = sbr.rel target = $region3
    $region8: #{tpu_custom_call.1} parent=1 // loop_exit
      _
    %1704 = vsyncpa [#allocation3], 1
    %s1705 = scalar_lea.sflag [#allocation3], 1
    %1706 = vsyncpa %s1705, 1

</llo_original>
